<compile_context>
chip_gen: v6e
topology: v6e:2x2x1
jax: 0.10.0
libtpu: 0.0.40
codegen_flags: <defaults>
</compile_context>

<pallas_src>
import jax
import jax.numpy as jnp
import numpy as np
from jax.experimental import pallas as pl
from jax.experimental.pallas import tpu as pltpu


def _iota_f32(shape, dim):
    # int32 iota + convert (both guaranteed Mosaic lowerings).
    return jax.lax.broadcasted_iota(jnp.int32, shape, dim).astype(jnp.float32)


def _floor_div(x, n):
    # Exact floor(x / n) for small non-negative integer-valued f32 x.
    return jnp.floor(x * (1.0 / n) + 1e-6)


def ntl_kernel(zq_ref, zc_ref, m2_ref, w_ref, b_ref, out_ref):
    nq, d = zq_ref.shape
    nc, _ = zc_ref.shape
    dd = d * d
    npairs = nq * nc
    f32 = jnp.float32

    # ---- On-chip 0/1 selector matrices (iota + compare, no HBM traffic) ----
    # Pair-row index r = q*nc + c.
    rr = _iota_f32((npairs, nq), 0)
    qq = _iota_f32((npairs, nq), 1)
    R = (_floor_div(rr, nc) == qq).astype(f32)            # R[r, q] = [r//nc == q]

    rr2 = _iota_f32((npairs, nc), 0)
    cc = _iota_f32((npairs, nc), 1)
    r_mod = rr2 - nc * _floor_div(rr2, nc)
    C = (r_mod == cc).astype(f32)                         # C[r, c] = [r%nc == c]

    # Contraction-lane index k = i*d + e.
    ii = _iota_f32((d, dd), 0)
    kk = _iota_f32((d, dd), 1)
    k_div = _floor_div(kk, d)
    E = (k_div == ii).astype(f32)                         # E[i, k] = [k//d == i]
    T = ((kk - d * k_div) == ii).astype(f32)              # T[e, k] = [k%d  == e]

    # ---- Build X = Kronecker outer product, entirely in VMEM (MXU + VPU) ----
    zq_rows = jnp.dot(R, zq_ref[...], preferred_element_type=f32)   # (npairs, d)
    zc_rows = jnp.dot(C, zc_ref[...], preferred_element_type=f32)   # (npairs, d)
    zq_exp = jnp.dot(zq_rows, E, preferred_element_type=f32)        # (npairs, dd)
    zc_exp = jnp.dot(zc_rows, T, preferred_element_type=f32)        # (npairs, dd)
    x = zq_exp * zc_exp                           # X[r, i*d+e] = z_q[q,i]*z_c[c,e]

    # ---- One lane-dense MXU matmul over the full d*d contraction ----
    scores = jnp.dot(x, m2_ref[...], preferred_element_type=f32)    # (npairs, S_pad)

    # ---- Epilogue: ReLU + weighted slice reduction (VPU mul + XLU lane sum) ----
    v = jnp.maximum(scores, 0.0)
    r = jnp.sum(v * w_ref[...], axis=-1, keepdims=True)             # (npairs, 1)
    out_ref[...] = (r + b_ref[0]).astype(out_ref.dtype)


def init_ntl_packed(M, fc_w, fc_b):
    """One-time weight repack (module init, NOT per call).

    Returns (m2, w_row, b):
      m2[i*d+e, s] = M[s, i, e], zero-padded to a 128-lane multiple of slices,
      w_row        = fc weight row, zero-padded (padded slices contribute 0),
      b            = fc bias (1,).
    """
    M = np.asarray(M, dtype=np.float32)
    n_slice, d, _ = M.shape
    s_pad = ((n_slice + 127) // 128) * 128
    m2 = np.zeros((d * d, s_pad), dtype=np.float32)
    m2[:, :n_slice] = M.reshape(n_slice, d * d).T
    w_row = np.zeros((1, s_pad), dtype=np.float32)
    w_row[0, :n_slice] = np.asarray(fc_w, dtype=np.float32).reshape(-1)
    b = np.asarray(fc_b, dtype=np.float32).reshape(1)
    return jnp.asarray(m2), jnp.asarray(w_row), jnp.asarray(b)


@jax.jit
def ntl_relation(z_q, z_c, m2, w_row, fc_b):
    """z_q: (nq, d), z_c: (nc, d), m2: (d*d, S_pad), w_row: (1, S_pad), fc_b: (1,)."""
    nq, d = z_q.shape
    nc, _ = z_c.shape
    dd, s_pad = m2.shape

    out_flat = pl.pallas_call(
        ntl_kernel,
        out_shape=jax.ShapeDtypeStruct((nq * nc, 1), jnp.float32),
        grid_spec=pltpu.PrefetchScalarGridSpec(
            num_scalar_prefetch=0,
            grid=(1,),  # single step: whole problem fits VMEM, no per-step overhead
            in_specs=[
                pl.BlockSpec((nq, d), lambda i: (0, 0)),       # z_q (8, 32)
                pl.BlockSpec((nc, d), lambda i: (0, 0)),       # z_c (8, 32)
                pl.BlockSpec((dd, s_pad), lambda i: (0, 0)),   # M2  (1024, 128), cached
                pl.BlockSpec((1, s_pad), lambda i: (0, 0)),    # fc weight row, cached
                pl.BlockSpec(memory_space=pltpu.SMEM),         # fc bias (1,)
            ],
            out_specs=pl.BlockSpec((nq * nc, 1), lambda i: (0, 0)),
        ),
        compiler_params=pltpu.CompilerParams(
            dimension_semantics=("arbitrary",),
        ),
    )(z_q, z_c, m2, w_row, fc_b)

    return out_flat.reshape(nq, nc)


def reference(z_q, z_c, M, fc_w, fc_b):
    # einsum reference of the same math (eval-mode dropout = identity);
    # HIGHEST precision so the reference is true f32.
    score = jnp.einsum("qd,sde,ce->qcs", z_q, M, z_c,
                       precision=jax.lax.Precision.HIGHEST)
    v = jnp.maximum(score, 0.0)
    return jnp.einsum("qcs,s->qc", v, fc_w[0],
                      precision=jax.lax.Precision.HIGHEST) + fc_b[0]


if __name__ == "__main__":
    input_dim = 32
    n_slice = 100
    n_query = 8
    n_class = 8

    # Deterministic parameter init, mirroring the module's __init__:
    #   M ~ randn(S, d, d), normalized per-slice by Frobenius norm
    #   fc = Linear(n_slice, 1)  (uniform +-1/sqrt(n_slice))
    rng = np.random.RandomState(0)
    M_np = rng.randn(n_slice, input_dim, input_dim).astype(np.float32)
    M_np = M_np / np.linalg.norm(M_np, axis=(1, 2))[:, None, None]
    bound = 1.0 / np.sqrt(n_slice)
    fc_w_np = rng.uniform(-bound, bound, size=(1, n_slice)).astype(np.float32)
    fc_b_np = rng.uniform(-bound, bound, size=(1,)).astype(np.float32)

    # One-time packed weights (review opt #1: hoisted out of the per-call path).
    m2, w_row, fc_b = init_ntl_packed(M_np, fc_w_np, fc_b_np)

    key = jax.random.PRNGKey(0)
    kq, kc = jax.random.split(key)
    z_q = jax.random.normal(kq, (n_query, input_dim), dtype=jnp.float32)
    z_c = jax.random.normal(kc, (n_class, input_dim), dtype=jnp.float32)

    out = ntl_relation(z_q, z_c, m2, w_row, fc_b)
    out = jax.block_until_ready(out)

    ref = reference(z_q, z_c, jnp.asarray(M_np), jnp.asarray(fc_w_np),
                    jnp.asarray(fc_b_np))
    np.testing.assert_allclose(np.asarray(out), np.asarray(ref), rtol=5e-4, atol=5e-5)

    print("KERNEL_OK")
</pallas_src>

<mosaic_0001>
module attributes {stable_mosaic.version = 11 : i64} {
  func.func @ntl_kernel(%arg0: i32, %arg1: memref<8x32xf32, #tpu.memory_space<vmem>>, %arg2: memref<8x32xf32, #tpu.memory_space<vmem>>, %arg3: memref<1024x128xf32, #tpu.memory_space<vmem>>, %arg4: memref<1x128xf32, #tpu.memory_space<vmem>>, %arg5: memref<1xf32, #tpu.memory_space<smem>>, %arg6: memref<64x1xf32, #tpu.memory_space<vmem>>) attributes {dimension_semantics = [#tpu.dimension_semantics<arbitrary>], iteration_bounds = array<i64: 1>, scalar_prefetch = 0 : i64, scratch_operands = 0 : i64, tpu.core_type = #tpu.core_type<tc>, window_params = [{pipeline_mode = #tpu.pipeline_mode<synchronous>, transform_indices = @transform_0, window_bounds = array<i64: 8, 32>}, {pipeline_mode = #tpu.pipeline_mode<synchronous>, transform_indices = @transform_1, window_bounds = array<i64: 8, 32>}, {pipeline_mode = #tpu.pipeline_mode<synchronous>, transform_indices = @transform_2, window_bounds = array<i64: 1024, 128>}, {pipeline_mode = #tpu.pipeline_mode<synchronous>, transform_indices = @transform_3, window_bounds = array<i64: 1, 128>}, {transform_indices = @transform_4, window_bounds = array<i64: 1>}, {pipeline_mode = #tpu.pipeline_mode<synchronous>, transform_indices = @transform_5, window_bounds = array<i64: 64, 1>}]} {
    %0 = tpu.iota {dimensions = array<i32: 0>} : vector<64x8xi32>
    %1 = arith.sitofp %0 : vector<64x8xi32> to vector<64x8xf32>
    %2 = tpu.iota {dimensions = array<i32: 1>} : vector<64x8xi32>
    %3 = arith.sitofp %2 : vector<64x8xi32> to vector<64x8xf32>
    %cst = arith.constant 1.250000e-01 : f32
    %4 = vector.broadcast %cst : f32 to vector<64x8xf32>
    %5 = arith.mulf %1, %4 : vector<64x8xf32>
    %cst_0 = arith.constant 9.99999997E-7 : f32
    %6 = vector.broadcast %cst_0 : f32 to vector<64x8xf32>
    %7 = arith.addf %5, %6 : vector<64x8xf32>
    %8 = math.floor %7 : vector<64x8xf32>
    %9 = arith.cmpf oeq, %8, %3 : vector<64x8xf32>
    %10 = arith.extui %9 : vector<64x8xi1> to vector<64x8xi32>
    %11 = arith.sitofp %10 : vector<64x8xi32> to vector<64x8xf32>
    %12 = tpu.iota {dimensions = array<i32: 0>} : vector<64x8xi32>
    %13 = arith.sitofp %12 : vector<64x8xi32> to vector<64x8xf32>
    %14 = tpu.iota {dimensions = array<i32: 1>} : vector<64x8xi32>
    %15 = arith.sitofp %14 : vector<64x8xi32> to vector<64x8xf32>
    %cst_1 = arith.constant 1.250000e-01 : f32
    %16 = vector.broadcast %cst_1 : f32 to vector<64x8xf32>
    %17 = arith.mulf %13, %16 : vector<64x8xf32>
    %cst_2 = arith.constant 9.99999997E-7 : f32
    %18 = vector.broadcast %cst_2 : f32 to vector<64x8xf32>
    %19 = arith.addf %17, %18 : vector<64x8xf32>
    %20 = math.floor %19 : vector<64x8xf32>
    %cst_3 = arith.constant 8.000000e+00 : f32
    %21 = vector.broadcast %cst_3 : f32 to vector<64x8xf32>
    %22 = arith.mulf %21, %20 : vector<64x8xf32>
    %23 = arith.subf %13, %22 : vector<64x8xf32>
    %24 = arith.cmpf oeq, %23, %15 : vector<64x8xf32>
    %25 = arith.extui %24 : vector<64x8xi1> to vector<64x8xi32>
    %26 = arith.sitofp %25 : vector<64x8xi32> to vector<64x8xf32>
    %27 = tpu.iota {dimensions = array<i32: 0>} : vector<32x1024xi32>
    %28 = arith.sitofp %27 : vector<32x1024xi32> to vector<32x1024xf32>
    %29 = tpu.iota {dimensions = array<i32: 1>} : vector<32x1024xi32>
    %30 = arith.sitofp %29 : vector<32x1024xi32> to vector<32x1024xf32>
    %cst_4 = arith.constant 3.125000e-02 : f32
    %31 = vector.broadcast %cst_4 : f32 to vector<32x1024xf32>
    %32 = arith.mulf %30, %31 : vector<32x1024xf32>
    %cst_5 = arith.constant 9.99999997E-7 : f32
    %33 = vector.broadcast %cst_5 : f32 to vector<32x1024xf32>
    %34 = arith.addf %32, %33 : vector<32x1024xf32>
    %35 = math.floor %34 : vector<32x1024xf32>
    %36 = arith.cmpf oeq, %35, %28 : vector<32x1024xf32>
    %37 = arith.extui %36 : vector<32x1024xi1> to vector<32x1024xi32>
    %38 = arith.sitofp %37 : vector<32x1024xi32> to vector<32x1024xf32>
    %cst_6 = arith.constant 3.200000e+01 : f32
    %39 = vector.broadcast %cst_6 : f32 to vector<32x1024xf32>
    %40 = arith.mulf %39, %35 : vector<32x1024xf32>
    %41 = arith.subf %30, %40 : vector<32x1024xf32>
    %42 = arith.cmpf oeq, %41, %28 : vector<32x1024xf32>
    %43 = arith.extui %42 : vector<32x1024xi1> to vector<32x1024xi32>
    %44 = arith.sitofp %43 : vector<32x1024xi32> to vector<32x1024xf32>
    %c0 = arith.constant 0 : index
    %c0_7 = arith.constant 0 : index
    %45 = vector.load %arg1[%c0, %c0_7] : memref<8x32xf32, #tpu.memory_space<vmem>>, vector<8x32xf32>
    %cst_8 = arith.constant dense<0.000000e+00> : vector<64x32xf32>
    %46 = tpu.matmul %11, %45, %cst_8 {dimension_numbers = #tpu.dot_dimension_numbers<[1], [0], [0], [1], [0, 0, 1, 1], [], []>} : vector<64x8xf32>, vector<8x32xf32>, vector<64x32xf32> -> vector<64x32xf32>
    %c0_9 = arith.constant 0 : index
    %c0_10 = arith.constant 0 : index
    %47 = vector.load %arg2[%c0_9, %c0_10] : memref<8x32xf32, #tpu.memory_space<vmem>>, vector<8x32xf32>
    %cst_11 = arith.constant dense<0.000000e+00> : vector<64x32xf32>
    %48 = tpu.matmul %26, %47, %cst_11 {dimension_numbers = #tpu.dot_dimension_numbers<[1], [0], [0], [1], [0, 0, 1, 1], [], []>} : vector<64x8xf32>, vector<8x32xf32>, vector<64x32xf32> -> vector<64x32xf32>
    %cst_12 = arith.constant dense<0.000000e+00> : vector<64x1024xf32>
    %49 = tpu.matmul %46, %38, %cst_12 {dimension_numbers = #tpu.dot_dimension_numbers<[1], [0], [0], [1], [0, 0, 1, 1], [], []>} : vector<64x32xf32>, vector<32x1024xf32>, vector<64x1024xf32> -> vector<64x1024xf32>
    %cst_13 = arith.constant dense<0.000000e+00> : vector<64x1024xf32>
    %50 = tpu.matmul %48, %44, %cst_13 {dimension_numbers = #tpu.dot_dimension_numbers<[1], [0], [0], [1], [0, 0, 1, 1], [], []>} : vector<64x32xf32>, vector<32x1024xf32>, vector<64x1024xf32> -> vector<64x1024xf32>
    %51 = arith.mulf %49, %50 : vector<64x1024xf32>
    %c0_14 = arith.constant 0 : index
    %c0_15 = arith.constant 0 : index
    %52 = vector.load %arg3[%c0_14, %c0_15] : memref<1024x128xf32, #tpu.memory_space<vmem>>, vector<1024x128xf32>
    %cst_16 = arith.constant dense<0.000000e+00> : vector<64x128xf32>
    %53 = tpu.matmul %51, %52, %cst_16 {dimension_numbers = #tpu.dot_dimension_numbers<[1], [0], [0], [1], [0, 0, 1, 1], [], []>} : vector<64x1024xf32>, vector<1024x128xf32>, vector<64x128xf32> -> vector<64x128xf32>
    %cst_17 = arith.constant 0.000000e+00 : f32
    %54 = vector.broadcast %cst_17 : f32 to vector<64x128xf32>
    %55 = arith.maximumf %53, %54 : vector<64x128xf32>
    %c0_18 = arith.constant 0 : index
    %c0_19 = arith.constant 0 : index
    %56 = vector.load %arg4[%c0_18, %c0_19] : memref<1x128xf32, #tpu.memory_space<vmem>>, vector<1x128xf32>
    %57 = vector.broadcast %56 : vector<1x128xf32> to vector<64x128xf32>
    %58 = arith.mulf %55, %57 : vector<64x128xf32>
    %cst_20 = arith.constant dense<0.000000e+00> : vector<64xf32>
    %59 = vector.multi_reduction <add>, %58, %cst_20 [1] : vector<64x128xf32> to vector<64xf32>
    %60 = vector.shape_cast %59 : vector<64xf32> to vector<64x1xf32>
    %c0_21 = arith.constant 0 : index
    %61 = memref.load %arg5[%c0_21] : memref<1xf32, #tpu.memory_space<smem>>
    %62 = vector.broadcast %61 : f32 to vector<64x1xf32>
    %63 = arith.addf %60, %62 : vector<64x1xf32>
    %c0_22 = arith.constant 0 : index
    %c0_23 = arith.constant 0 : index
    %64 = vector.load %arg6[%c0_22, %c0_23] : memref<64x1xf32, #tpu.memory_space<vmem>>, vector<64x1xf32>
    tpu.vector_store %arg6[%c0_22, %c0_23], %63 {strides = array<i32>} : memref<64x1xf32, #tpu.memory_space<vmem>>, vector<64x1xf32>,
    return
  }
  func.func @transform_0(%arg0: i32) -> (i32, i32) {
    %c0_i32 = arith.constant 0 : i32
    %c0_i32_0 = arith.constant 0 : i32
    %c0_i32_1 = arith.constant 0 : i32
    return %c0_i32, %c0_i32_0 : i32, i32
  }
  func.func @transform_1(%arg0: i32) -> (i32, i32) {
    %c0_i32 = arith.constant 0 : i32
    %c0_i32_0 = arith.constant 0 : i32
    %c0_i32_1 = arith.constant 0 : i32
    return %c0_i32, %c0_i32_0 : i32, i32
  }
  func.func @transform_2(%arg0: i32) -> (i32, i32) {
    %c0_i32 = arith.constant 0 : i32
    %c0_i32_0 = arith.constant 0 : i32
    %c0_i32_1 = arith.constant 0 : i32
    return %c0_i32, %c0_i32_0 : i32, i32
  }
  func.func @transform_3(%arg0: i32) -> (i32, i32) {
    %c0_i32 = arith.constant 0 : i32
    %c0_i32_0 = arith.constant 0 : i32
    %c0_i32_1 = arith.constant 0 : i32
    return %c0_i32, %c0_i32_0 : i32, i32
  }
  func.func @transform_4(%arg0: i32) -> i32 {
    %c0_i32 = arith.constant 0 : i32
    %c0_i32_0 = arith.constant 0 : i32
    return %c0_i32 : i32
  }
  func.func @transform_5(%arg0: i32) -> (i32, i32) {
    %c0_i32 = arith.constant 0 : i32
    %c0_i32_0 = arith.constant 0 : i32
    %c0_i32_1 = arith.constant 0 : i32
    return %c0_i32, %c0_i32_0 : i32, i32
  }
}

</mosaic_0001>

<llo_original>
// kernel: ntl_relation.1
$region0: #{ntl_relation.1}
  #allocation0 [shape = 'u32[]', space=smem, size = 0x4, offset = 0x4, fixed_abs, tag = 'smem constant byte address 0x4 - core index']
  #allocation1 [shape = 'u32[144,128]{1,0:T(1,128)}', space=vmem, size = 0x12000, scoped, tag = 'internal scratch']
  #allocation2 [shape = 'f32[1]{0:T(128)S(6)}', space=smem, size = 0x200, scoped, tag = 'scoped memory for ntl_relation.1']
  %s0 = inlined_call_operand.hbm [shape: f32[8,32], index: 0, kind: input, shape index: {}]
  %s1 = inlined_call_operand.hbm [shape: f32[8,32], index: 1, kind: input, shape index: {}]
  %s2 = inlined_call_operand.hbm [shape: f32[1024,128], index: 2, kind: input, shape index: {}]
  %s3 = inlined_call_operand.vmem [shape: f32[1,128], index: 3, kind: input, shape index: {}]
  %s4 = inlined_call_operand.<no memory space> [shape: f32[1], index: 4, kind: input, shape index: {}]
  %s5 = inlined_call_operand.vmem [shape: f32[64,1], index: 5, kind: output, shape index: {}]
  %s6 = sld [smem:[#allocation0]]
  $region42: #{ntl_relation.1} parent=0
    _
  %s8 = ssub.s32 1, %s6
  %s9 = scalar_select 0, %s8, %s6
  %10 = sst [smem:[#allocation2]] %s4
  $region1: #{ntl_relation.1} parent=0
    #allocation3 [shape = 'u8[4096]{0}', space=vmem, size = 0x1000, scoped, tag = 'input window, operand 0, single buffered']
    #allocation4 [shape = 's32[1]{0}', space=sflag, size = 0x4, scoped, tag = 'scoped memory for ntl_relation.1']
    #allocation5 [shape = 'u8[4096]{0}', space=vmem, size = 0x1000, scoped, tag = 'input window, operand 1, single buffered']
    #allocation6 [shape = 's32[1]{0}', space=sflag, size = 0x4, scoped, tag = 'scoped memory for ntl_relation.1']
    #allocation7 [shape = 'u8[524288]{0}', space=vmem, size = 0x80000, scoped, tag = 'input window, operand 2, single buffered']
    %11 = vsyncpa [#allocation4], 0
    %12 = vsyncpa [#allocation6], 0
    // Predicated region
    $region2: #{ntl_relation.1} parent=1 // pred_check
      _
    $region3: #{ntl_relation.1} parent=1 // pred_check_branch
      %14 = sbr.rel (0) target = $region5
    $region4: #{ntl_relation.1} parent=1 // pred_region
      %s16 = ssub.s32 128, 128
      %17 = vsyncadd [#allocation4], %s16
      %s19 = sshll.u32 [#allocation3], 4
      %s20 = int_to_ptr.vmem [resolvable:$true] %s19
      %22 = dma.hbm_to_vmem [thread:$0]  %s0, 128, %s20, [#allocation4]
    $region5: #{ntl_relation.1} parent=1 // pred_fallthru
      _
    // Predicated region
    $region6: #{ntl_relation.1} parent=1 // pred_check
      _
    $region7: #{ntl_relation.1} parent=1 // pred_check_branch
      %24 = sbr.rel (0) target = $region9
    $region8: #{ntl_relation.1} parent=1 // pred_region
      %s26 = ssub.s32 128, 128
      %27 = vsyncadd [#allocation6], %s26
      %s29 = sshll.u32 [#allocation5], 4
      %s30 = int_to_ptr.vmem [resolvable:$true] %s29
      %32 = dma.hbm_to_vmem [thread:$0]  %s1, 128, %s30, [#allocation6]
    $region9: #{ntl_relation.1} parent=1 // pred_fallthru
      _
    // Predicated region
    $region10: #{ntl_relation.1} parent=1 // pred_check
      _
    $region11: #{ntl_relation.1} parent=1 // pred_check_branch
      %34 = sbr.rel (0) target = $region13
    $region12: #{ntl_relation.1} parent=1 // pred_region
      %s36 = ssub.s32 16384, 16384
      %37 = vsyncadd [#allocation6], %s36
      %s38 = sshll.u32 [#allocation7], 4
      %s39 = int_to_ptr.vmem [resolvable:$true] %s38
      %44 = dma.hbm_to_vmem [thread:$0]  %s2, 16384, %s39, [#allocation6], 128, 128, 8
    $region13: #{ntl_relation.1} parent=1 // pred_fallthru
      _
    // Predicated region
    $region14: #{ntl_relation.1} parent=1 // pred_check
      _
    $region15: #{ntl_relation.1} parent=1 // pred_check_branch
      %46 = sbr.rel (0) target = $region17
    $region16: #{ntl_relation.1} parent=1 // pred_region
      _
    $region17: #{ntl_relation.1} parent=1 // pred_fallthru
      _
    // Predicated region
    $region18: #{ntl_relation.1} parent=1 // pred_check
      _
    $region19: #{ntl_relation.1} parent=1 // pred_check_branch
      %48 = sbr.rel (0) target = $region21
    $region20: #{ntl_relation.1} parent=1 // pred_region
      _
    $region21: #{ntl_relation.1} parent=1 // pred_fallthru
      _
    // Predicated region
    $region22: #{ntl_relation.1} parent=1 // pred_check
      _
    $region23: #{ntl_relation.1} parent=1 // pred_check_branch
      %50 = sbr.rel (0) target = $region25
    $region24: #{ntl_relation.1} parent=1 // pred_region
      %51 = dma.done [#allocation4], 128
    $region25: #{ntl_relation.1} parent=1 // pred_fallthru
      _
    // Predicated region
    $region26: #{ntl_relation.1} parent=1 // pred_check
      _
    $region27: #{ntl_relation.1} parent=1 // pred_check_branch
      %53 = sbr.rel (0) target = $region29
    $region28: #{ntl_relation.1} parent=1 // pred_region
      %54 = dma.done [#allocation6], 128
    $region29: #{ntl_relation.1} parent=1 // pred_fallthru
      _
    // Predicated region
    $region30: #{ntl_relation.1} parent=1 // pred_check
      _
    $region31: #{ntl_relation.1} parent=1 // pred_check_branch
      %56 = sbr.rel (0) target = $region33
    $region32: #{ntl_relation.1} parent=1 // pred_region
      %57 = dma.done [#allocation6], 16384
    $region33: #{ntl_relation.1} parent=1 // pred_fallthru
      _
    %v58 = vlaneseq
    %v59 = vshrl.u32 %v58, 7
    %v60 = vadd.s32 %v59, 8
    %v61 = vadd.s32 %v59, 16
    %v62 = vadd.s32 %v59, 24
    %v63 = vadd.s32 %v59, 32
    %v64 = vadd.s32 %v59, 40
    %v65 = vadd.s32 %v59, 48
    %v66 = vadd.s32 %v59, 56
    %v67 = vcvt.s32.f32 %v59
    %v68 = vcvt.s32.f32 %v60
    %v69 = vcvt.s32.f32 %v61
    %v70 = vcvt.s32.f32 %v62
    %v71 = vcvt.s32.f32 %v63
    %v72 = vcvt.s32.f32 %v64
    %v73 = vcvt.s32.f32 %v65
    %v74 = vcvt.s32.f32 %v66
    %v75 = vlaneseq
    %v76 = vand.u32 %v75, 127
    %v77 = vcvt.s32.f32 %v76
    %v78 = vmul.f32 %v67, 0.125
    %v79 = vmul.f32 %v68, 0.125
    %v80 = vmul.f32 %v69, 0.125
    %v81 = vmul.f32 %v70, 0.125
    %v82 = vmul.f32 %v71, 0.125
    %v83 = vmul.f32 %v72, 0.125
    %v84 = vmul.f32 %v73, 0.125
    %v85 = vmul.f32 %v74, 0.125
    %v86 = vadd.f32 %v78, 1e-06
    %v87 = vadd.f32 %v79, 1e-06
    %v88 = vadd.f32 %v80, 1e-06
    %v89 = vadd.f32 %v81, 1e-06
    %v90 = vadd.f32 %v82, 1e-06
    %v91 = vadd.f32 %v83, 1e-06
    %v92 = vadd.f32 %v84, 1e-06
    %v93 = vadd.f32 %v85, 1e-06
    %v94 = vfloor.f32 %v86
    %v95 = vfloor.f32 %v87
    %v96 = vfloor.f32 %v88
    %v97 = vfloor.f32 %v89
    %v98 = vfloor.f32 %v90
    %v99 = vfloor.f32 %v91
    %v100 = vfloor.f32 %v92
    %v101 = vfloor.f32 %v93
    %vm102 = vcmp.eq.f32.partialorder %v94, %v77
    %vm103 = vcmp.eq.f32.partialorder %v95, %v77
    %vm104 = vcmp.eq.f32.partialorder %v96, %v77
    %vm105 = vcmp.eq.f32.partialorder %v97, %v77
    %vm106 = vcmp.eq.f32.partialorder %v98, %v77
    %vm107 = vcmp.eq.f32.partialorder %v99, %v77
    %vm108 = vcmp.eq.f32.partialorder %v100, %v77
    %vm109 = vcmp.eq.f32.partialorder %v101, %v77
    %v110 = vsel %vm102, 1, 0
    %v111 = vsel %vm103, 1, 0
    %v112 = vsel %vm104, 1, 0
    %v113 = vsel %vm105, 1, 0
    %v114 = vsel %vm106, 1, 0
    %v115 = vsel %vm107, 1, 0
    %v116 = vsel %vm108, 1, 0
    %v117 = vsel %vm109, 1, 0
    %v118 = vcvt.s32.f32 %v110
    %v119 = vcvt.s32.f32 %v111
    %v120 = vcvt.s32.f32 %v112
    %v121 = vcvt.s32.f32 %v113
    %v122 = vcvt.s32.f32 %v114
    %v123 = vcvt.s32.f32 %v115
    %v124 = vcvt.s32.f32 %v116
    %v125 = vcvt.s32.f32 %v117
    %v126 = vmul.f32 %v94, 8.0
    %v127 = vmul.f32 %v95, 8.0
    %v128 = vmul.f32 %v96, 8.0
    %v129 = vmul.f32 %v97, 8.0
    %v130 = vmul.f32 %v98, 8.0
    %v131 = vmul.f32 %v99, 8.0
    %v132 = vmul.f32 %v100, 8.0
    %v133 = vmul.f32 %v101, 8.0
    %v134 = vsub.f32 %v67, %v126
    %v135 = vsub.f32 %v68, %v127
    %v136 = vsub.f32 %v69, %v128
    %v137 = vsub.f32 %v70, %v129
    %v138 = vsub.f32 %v71, %v130
    %v139 = vsub.f32 %v72, %v131
    %v140 = vsub.f32 %v73, %v132
    %v141 = vsub.f32 %v74, %v133
    %vm142 = vcmp.eq.f32.partialorder %v134, %v77
    %vm143 = vcmp.eq.f32.partialorder %v135, %v77
    %vm144 = vcmp.eq.f32.partialorder %v136, %v77
    %vm145 = vcmp.eq.f32.partialorder %v137, %v77
    %vm146 = vcmp.eq.f32.partialorder %v138, %v77
    %vm147 = vcmp.eq.f32.partialorder %v139, %v77
    %vm148 = vcmp.eq.f32.partialorder %v140, %v77
    %vm149 = vcmp.eq.f32.partialorder %v141, %v77
    %v150 = vsel %vm142, 1, 0
    %v151 = vsel %vm143, 1, 0
    %v152 = vsel %vm144, 1, 0
    %v153 = vsel %vm145, 1, 0
    %v154 = vsel %vm146, 1, 0
    %v155 = vsel %vm147, 1, 0
    %v156 = vsel %vm148, 1, 0
    %v157 = vsel %vm149, 1, 0
    %v158 = vcvt.s32.f32 %v150
    %v159 = vcvt.s32.f32 %v151
    %v160 = vcvt.s32.f32 %v152
    %v161 = vcvt.s32.f32 %v153
    %v162 = vcvt.s32.f32 %v154
    %v163 = vcvt.s32.f32 %v155
    %v164 = vcvt.s32.f32 %v156
    %v165 = vcvt.s32.f32 %v157
    %v166 = vadd.s32 %v76, 128
    %v167 = vadd.s32 %v76, 256
    %v168 = vadd.s32 %v76, 384
    %v169 = vadd.s32 %v76, 512
    %v170 = vadd.s32 %v76, 640
    %v171 = vadd.s32 %v76, 768
    %v172 = vadd.s32 %v76, 896
    %v173 = vcvt.s32.f32 %v166
    %v174 = vcvt.s32.f32 %v167
    %v175 = vcvt.s32.f32 %v168
    %v176 = vcvt.s32.f32 %v169
    %v177 = vcvt.s32.f32 %v170
    %v178 = vcvt.s32.f32 %v171
    %v179 = vcvt.s32.f32 %v172
    %v180 = vmul.f32 %v77, 0.03125
    %v181 = vmul.f32 %v173, 0.03125
    %v182 = vmul.f32 %v174, 0.03125
    %v183 = vmul.f32 %v175, 0.03125
    %v184 = vmul.f32 %v176, 0.03125
    %v185 = vmul.f32 %v177, 0.03125
    %v186 = vmul.f32 %v178, 0.03125
    %v187 = vmul.f32 %v179, 0.03125
    %v188 = vadd.f32 %v180, 1e-06
    %v189 = vadd.f32 %v181, 1e-06
    %v190 = vadd.f32 %v182, 1e-06
    %v191 = vadd.f32 %v183, 1e-06
    %v192 = vadd.f32 %v184, 1e-06
    %v193 = vadd.f32 %v185, 1e-06
    %v194 = vadd.f32 %v186, 1e-06
    %v195 = vadd.f32 %v187, 1e-06
    %v196 = vfloor.f32 %v188
    %v197 = vfloor.f32 %v189
    %v198 = vfloor.f32 %v190
    %v199 = vfloor.f32 %v191
    %v200 = vfloor.f32 %v192
    %v201 = vfloor.f32 %v193
    %v202 = vfloor.f32 %v194
    %v203 = vfloor.f32 %v195
    %vm204 = vcmp.eq.f32.partialorder %v196, %v67
    %vm205 = vcmp.eq.f32.partialorder %v197, %v67
    %vm206 = vcmp.eq.f32.partialorder %v198, %v67
    %vm207 = vcmp.eq.f32.partialorder %v199, %v67
    %vm208 = vcmp.eq.f32.partialorder %v200, %v67
    %vm209 = vcmp.eq.f32.partialorder %v201, %v67
    %vm210 = vcmp.eq.f32.partialorder %v202, %v67
    %vm211 = vcmp.eq.f32.partialorder %v203, %v67
    %vm212 = vcmp.eq.f32.partialorder %v196, %v68
    %vm213 = vcmp.eq.f32.partialorder %v197, %v68
    %vm214 = vcmp.eq.f32.partialorder %v198, %v68
    %vm215 = vcmp.eq.f32.partialorder %v199, %v68
    %vm216 = vcmp.eq.f32.partialorder %v200, %v68
    %vm217 = vcmp.eq.f32.partialorder %v201, %v68
    %vm218 = vcmp.eq.f32.partialorder %v202, %v68
    %vm219 = vcmp.eq.f32.partialorder %v203, %v68
    %vm220 = vcmp.eq.f32.partialorder %v196, %v69
    %vm221 = vcmp.eq.f32.partialorder %v197, %v69
    %vm222 = vcmp.eq.f32.partialorder %v198, %v69
    %vm223 = vcmp.eq.f32.partialorder %v199, %v69
    %vm224 = vcmp.eq.f32.partialorder %v200, %v69
    %vm225 = vcmp.eq.f32.partialorder %v201, %v69
    %vm226 = vcmp.eq.f32.partialorder %v202, %v69
    %vm227 = vcmp.eq.f32.partialorder %v203, %v69
    %vm228 = vcmp.eq.f32.partialorder %v196, %v70
    %vm229 = vcmp.eq.f32.partialorder %v197, %v70
    %vm230 = vcmp.eq.f32.partialorder %v198, %v70
    %vm231 = vcmp.eq.f32.partialorder %v199, %v70
    %vm232 = vcmp.eq.f32.partialorder %v200, %v70
    %vm233 = vcmp.eq.f32.partialorder %v201, %v70
    %vm234 = vcmp.eq.f32.partialorder %v202, %v70
    %vm235 = vcmp.eq.f32.partialorder %v203, %v70
    %v236 = vsel %vm204, 1, 0
    %v237 = vsel %vm205, 1, 0
    %v238 = vsel %vm206, 1, 0
    %v239 = vsel %vm207, 1, 0
    %v240 = vsel %vm208, 1, 0
    %v241 = vsel %vm209, 1, 0
    %v242 = vsel %vm210, 1, 0
    %v243 = vsel %vm211, 1, 0
    %v244 = vsel %vm212, 1, 0
    %v245 = vsel %vm213, 1, 0
    %v246 = vsel %vm214, 1, 0
    %v247 = vsel %vm215, 1, 0
    %v248 = vsel %vm216, 1, 0
    %v249 = vsel %vm217, 1, 0
    %v250 = vsel %vm218, 1, 0
    %v251 = vsel %vm219, 1, 0
    %v252 = vsel %vm220, 1, 0
    %v253 = vsel %vm221, 1, 0
    %v254 = vsel %vm222, 1, 0
    %v255 = vsel %vm223, 1, 0
    %v256 = vsel %vm224, 1, 0
    %v257 = vsel %vm225, 1, 0
    %v258 = vsel %vm226, 1, 0
    %v259 = vsel %vm227, 1, 0
    %v260 = vsel %vm228, 1, 0
    %v261 = vsel %vm229, 1, 0
    %v262 = vsel %vm230, 1, 0
    %v263 = vsel %vm231, 1, 0
    %v264 = vsel %vm232, 1, 0
    %v265 = vsel %vm233, 1, 0
    %v266 = vsel %vm234, 1, 0
    %v267 = vsel %vm235, 1, 0
    %v268 = vcvt.s32.f32 %v236
    %v269 = vcvt.s32.f32 %v237
    %v270 = vcvt.s32.f32 %v238
    %v271 = vcvt.s32.f32 %v239
    %v272 = vcvt.s32.f32 %v240
    %v273 = vcvt.s32.f32 %v241
    %v274 = vcvt.s32.f32 %v242
    %v275 = vcvt.s32.f32 %v243
    %v276 = vcvt.s32.f32 %v244
    %v277 = vcvt.s32.f32 %v245
    %v278 = vcvt.s32.f32 %v246
    %v279 = vcvt.s32.f32 %v247
    %v280 = vcvt.s32.f32 %v248
    %v281 = vcvt.s32.f32 %v249
    %v282 = vcvt.s32.f32 %v250
    %v283 = vcvt.s32.f32 %v251
    %v284 = vcvt.s32.f32 %v252
    %v285 = vcvt.s32.f32 %v253
    %v286 = vcvt.s32.f32 %v254
    %v287 = vcvt.s32.f32 %v255
    %v288 = vcvt.s32.f32 %v256
    %v289 = vcvt.s32.f32 %v257
    %v290 = vcvt.s32.f32 %v258
    %v291 = vcvt.s32.f32 %v259
    %v292 = vcvt.s32.f32 %v260
    %v293 = vcvt.s32.f32 %v261
    %v294 = vcvt.s32.f32 %v262
    %v295 = vcvt.s32.f32 %v263
    %v296 = vcvt.s32.f32 %v264
    %v297 = vcvt.s32.f32 %v265
    %v298 = vcvt.s32.f32 %v266
    %v299 = vcvt.s32.f32 %v267
    %v300 = vmul.f32 %v196, 32.0
    %v301 = vmul.f32 %v197, 32.0
    %v302 = vmul.f32 %v198, 32.0
    %v303 = vmul.f32 %v199, 32.0
    %v304 = vmul.f32 %v200, 32.0
    %v305 = vmul.f32 %v201, 32.0
    %v306 = vmul.f32 %v202, 32.0
    %v307 = vmul.f32 %v203, 32.0
    %v308 = vsub.f32 %v77, %v300
    %v309 = vsub.f32 %v173, %v301
    %v310 = vsub.f32 %v174, %v302
    %v311 = vsub.f32 %v175, %v303
    %v312 = vsub.f32 %v176, %v304
    %v313 = vsub.f32 %v177, %v305
    %v314 = vsub.f32 %v178, %v306
    %v315 = vsub.f32 %v179, %v307
    %vm316 = vcmp.eq.f32.partialorder %v308, %v67
    %vm317 = vcmp.eq.f32.partialorder %v309, %v67
    %vm318 = vcmp.eq.f32.partialorder %v310, %v67
    %vm319 = vcmp.eq.f32.partialorder %v311, %v67
    %vm320 = vcmp.eq.f32.partialorder %v312, %v67
    %vm321 = vcmp.eq.f32.partialorder %v313, %v67
    %vm322 = vcmp.eq.f32.partialorder %v314, %v67
    %vm323 = vcmp.eq.f32.partialorder %v315, %v67
    %vm324 = vcmp.eq.f32.partialorder %v308, %v68
    %vm325 = vcmp.eq.f32.partialorder %v309, %v68
    %vm326 = vcmp.eq.f32.partialorder %v310, %v68
    %vm327 = vcmp.eq.f32.partialorder %v311, %v68
    %vm328 = vcmp.eq.f32.partialorder %v312, %v68
    %vm329 = vcmp.eq.f32.partialorder %v313, %v68
    %vm330 = vcmp.eq.f32.partialorder %v314, %v68
    %vm331 = vcmp.eq.f32.partialorder %v315, %v68
    %vm332 = vcmp.eq.f32.partialorder %v308, %v69
    %vm333 = vcmp.eq.f32.partialorder %v309, %v69
    %vm334 = vcmp.eq.f32.partialorder %v310, %v69
    %vm335 = vcmp.eq.f32.partialorder %v311, %v69
    %vm336 = vcmp.eq.f32.partialorder %v312, %v69
    %vm337 = vcmp.eq.f32.partialorder %v313, %v69
    %vm338 = vcmp.eq.f32.partialorder %v314, %v69
    %vm339 = vcmp.eq.f32.partialorder %v315, %v69
    %vm340 = vcmp.eq.f32.partialorder %v308, %v70
    %vm341 = vcmp.eq.f32.partialorder %v309, %v70
    %vm342 = vcmp.eq.f32.partialorder %v310, %v70
    %vm343 = vcmp.eq.f32.partialorder %v311, %v70
    %vm344 = vcmp.eq.f32.partialorder %v312, %v70
    %vm345 = vcmp.eq.f32.partialorder %v313, %v70
    %vm346 = vcmp.eq.f32.partialorder %v314, %v70
    %vm347 = vcmp.eq.f32.partialorder %v315, %v70
    %v348 = vsel %vm316, 1, 0
    %v349 = vsel %vm317, 1, 0
    %v350 = vsel %vm318, 1, 0
    %v351 = vsel %vm319, 1, 0
    %v352 = vsel %vm320, 1, 0
    %v353 = vsel %vm321, 1, 0
    %v354 = vsel %vm322, 1, 0
    %v355 = vsel %vm323, 1, 0
    %v356 = vsel %vm324, 1, 0
    %v357 = vsel %vm325, 1, 0
    %v358 = vsel %vm326, 1, 0
    %v359 = vsel %vm327, 1, 0
    %v360 = vsel %vm328, 1, 0
    %v361 = vsel %vm329, 1, 0
    %v362 = vsel %vm330, 1, 0
    %v363 = vsel %vm331, 1, 0
    %v364 = vsel %vm332, 1, 0
    %v365 = vsel %vm333, 1, 0
    %v366 = vsel %vm334, 1, 0
    %v367 = vsel %vm335, 1, 0
    %v368 = vsel %vm336, 1, 0
    %v369 = vsel %vm337, 1, 0
    %v370 = vsel %vm338, 1, 0
    %v371 = vsel %vm339, 1, 0
    %v372 = vsel %vm340, 1, 0
    %v373 = vsel %vm341, 1, 0
    %v374 = vsel %vm342, 1, 0
    %v375 = vsel %vm343, 1, 0
    %v376 = vsel %vm344, 1, 0
    %v377 = vsel %vm345, 1, 0
    %v378 = vsel %vm346, 1, 0
    %v379 = vsel %vm347, 1, 0
    %v380 = vcvt.s32.f32 %v348
    %v381 = vcvt.s32.f32 %v349
    %v382 = vcvt.s32.f32 %v350
    %v383 = vcvt.s32.f32 %v351
    %v384 = vcvt.s32.f32 %v352
    %v385 = vcvt.s32.f32 %v353
    %v386 = vcvt.s32.f32 %v354
    %v387 = vcvt.s32.f32 %v355
    %v388 = vcvt.s32.f32 %v356
    %v389 = vcvt.s32.f32 %v357
    %v390 = vcvt.s32.f32 %v358
    %v391 = vcvt.s32.f32 %v359
    %v392 = vcvt.s32.f32 %v360
    %v393 = vcvt.s32.f32 %v361
    %v394 = vcvt.s32.f32 %v362
    %v395 = vcvt.s32.f32 %v363
    %v396 = vcvt.s32.f32 %v364
    %v397 = vcvt.s32.f32 %v365
    %v398 = vcvt.s32.f32 %v366
    %v399 = vcvt.s32.f32 %v367
    %v400 = vcvt.s32.f32 %v368
    %v401 = vcvt.s32.f32 %v369
    %v402 = vcvt.s32.f32 %v370
    %v403 = vcvt.s32.f32 %v371
    %v404 = vcvt.s32.f32 %v372
    %v405 = vcvt.s32.f32 %v373
    %v406 = vcvt.s32.f32 %v374
    %v407 = vcvt.s32.f32 %v375
    %v408 = vcvt.s32.f32 %v376
    %v409 = vcvt.s32.f32 %v377
    %v410 = vcvt.s32.f32 %v378
    %v411 = vcvt.s32.f32 %v379
    %v412 = vld [vmem:[#allocation3] sm:$0xff]
    %vm413 = vcmask 64512
    %v415 = vsel %vm413, %v118, 0
    %v418 = vsel %vm413, %v119, 0
    %v421 = vsel %vm413, %v120, 0
    %v424 = vsel %vm413, %v121, 0
    %v427 = vsel %vm413, %v122, 0
    %v430 = vsel %vm413, %v123, 0
    %v433 = vsel %vm413, %v124, 0
    %v436 = vsel %vm413, %v125, 0
    %438 = vmatprep.subr.mxu0 0.0
    %439 = vmatpush1.msra.mxu0 0.0
    %440 = vmatprep.subr.mxu0 0.0
    %441 = vmatpush1.msra.mxu0 0.0
    %442 = vmatprep.subr.mxu0 0.0
    %443 = vmatpush1.msra.mxu0 0.0
    %444 = vmatprep.subr.mxu0 0.0
    %445 = vmatpush1.msra.mxu0 0.0
    %446 = vmatprep.subr.mxu0 0.0
    %447 = vmatpush1.msra.mxu0 0.0
    %448 = vmatprep.subr.mxu0 0.0
    %449 = vmatpush1.msra.mxu0 0.0
    %450 = vmatprep.subr.mxu0 0.0
    %451 = vmatpush1.msra.mxu0 0.0
    %452 = vmatprep.subr.mxu0 0.0
    %453 = vmatpush1.msra.mxu0 0.0
    %454 = vmatprep.subr.mxu0 0.0
    %455 = vmatpush1.msra.mxu0 0.0
    %456 = vmatprep.subr.mxu0 0.0
    %457 = vmatpush1.msra.mxu0 0.0
    %458 = vmatprep.subr.mxu0 0.0
    %459 = vmatpush1.msra.mxu0 0.0
    %460 = vmatprep.subr.mxu0 0.0
    %461 = vmatpush1.msra.mxu0 0.0
    %462 = vmatprep.subr.mxu0 0.0
    %463 = vmatpush1.msra.mxu0 0.0
    %464 = vmatprep.subr.mxu0 0.0
    %465 = vmatpush1.msra.mxu0 0.0
    %466 = vmatprep.subr.mxu0 0.0
    %467 = vmatpush1.msra.mxu0 0.0
    %468 = vmatprep.subr.mxu0 0.0
    %469 = vmatpush1.msra.mxu0 %v412
    %470 = vmatprep.subr.mxu0 0.0
    %471 = vmatpush2.msra.mxu0 0.0
    %472 = vmatprep.subr.mxu0 0.0
    %473 = vmatpush2.msra.mxu0 0.0
    %474 = vmatprep.subr.mxu0 0.0
    %475 = vmatpush2.msra.mxu0 0.0
    %476 = vmatprep.subr.mxu0 0.0
    %477 = vmatpush2.msra.mxu0 0.0
    %478 = vmatprep.subr.mxu0 0.0
    %479 = vmatpush2.msra.mxu0 0.0
    %480 = vmatprep.subr.mxu0 0.0
    %481 = vmatpush2.msra.mxu0 0.0
    %482 = vmatprep.subr.mxu0 0.0
    %483 = vmatpush2.msra.mxu0 0.0
    %484 = vmatprep.subr.mxu0 0.0
    %485 = vmatpush2.msra.mxu0 0.0
    %486 = vmatprep.subr.mxu0 0.0
    %487 = vmatpush2.msra.mxu0 0.0
    %488 = vmatprep.subr.mxu0 0.0
    %489 = vmatpush2.msra.mxu0 0.0
    %490 = vmatprep.subr.mxu0 0.0
    %491 = vmatpush2.msra.mxu0 0.0
    %492 = vmatprep.subr.mxu0 0.0
    %493 = vmatpush2.msra.mxu0 0.0
    %494 = vmatprep.subr.mxu0 0.0
    %495 = vmatpush2.msra.mxu0 0.0
    %496 = vmatprep.subr.mxu0 0.0
    %497 = vmatpush2.msra.mxu0 0.0
    %498 = vmatprep.subr.mxu0 0.0
    %499 = vmatpush2.msra.mxu0 0.0
    %500 = vmatprep.subr.mxu0 0.0
    %501 = vmatpush2.msra.mxu0 0.0
    %502 = vmatprep.mubr.f32.mxu0 0.0
    %503 = vmatmul.mubr.f32.gmra.mxu0 %v415
    %v504 = vpop.f32.mrf.mxu0
    %v505 = vadd.f32 0.0, %v504
    %v506 = vpop.f32.mrf.mxu0
    %507 = vmatprep.mubr.f32.mxu0 0.0
    %508 = vmatmul.mubr.f32.gmra.mxu0 %v418
    %v509 = vpop.f32.mrf.mxu0
    %v510 = vadd.f32 0.0, %v509
    %v511 = vpop.f32.mrf.mxu0
    %512 = vmatprep.mubr.f32.mxu0 0.0
    %513 = vmatmul.mubr.f32.gmra.mxu0 %v421
    %v514 = vpop.f32.mrf.mxu0
    %v515 = vadd.f32 0.0, %v514
    %v516 = vpop.f32.mrf.mxu0
    %517 = vmatprep.mubr.f32.mxu0 0.0
    %518 = vmatmul.mubr.f32.gmra.mxu0 %v424
    %v519 = vpop.f32.mrf.mxu0
    %v520 = vadd.f32 0.0, %v519
    %v521 = vpop.f32.mrf.mxu0
    %522 = vmatprep.mubr.f32.mxu0 0.0
    %523 = vmatmul.mubr.f32.gmra.mxu0 %v427
    %v524 = vpop.f32.mrf.mxu0
    %v525 = vadd.f32 0.0, %v524
    %v526 = vpop.f32.mrf.mxu0
    %527 = vmatprep.mubr.f32.mxu0 0.0
    %528 = vmatmul.mubr.f32.gmra.mxu0 %v430
    %v529 = vpop.f32.mrf.mxu0
    %v530 = vadd.f32 0.0, %v529
    %v531 = vpop.f32.mrf.mxu0
    %532 = vmatprep.mubr.f32.mxu0 0.0
    %533 = vmatmul.mubr.f32.gmra.mxu0 %v433
    %v534 = vpop.f32.mrf.mxu0
    %v535 = vadd.f32 0.0, %v534
    %v536 = vpop.f32.mrf.mxu0
    %537 = vmatprep.mubr.f32.mxu0 0.0
    %538 = vmatmul.mubr.f32.gmra.mxu0 %v436
    %v539 = vpop.f32.mrf.mxu0
    %v540 = vadd.f32 0.0, %v539
    %v541 = vpop.f32.mrf.mxu0
    %542 = vdwg.mxu0
    %v543 = vld [vmem:[#allocation5] sm:$0xff]
    %v545 = vsel %vm413, %v158, 0
    %v548 = vsel %vm413, %v159, 0
    %v551 = vsel %vm413, %v160, 0
    %v554 = vsel %vm413, %v161, 0
    %v557 = vsel %vm413, %v162, 0
    %v560 = vsel %vm413, %v163, 0
    %v563 = vsel %vm413, %v164, 0
    %v566 = vsel %vm413, %v165, 0
    %568 = vmatprep.subr.mxu0 0.0
    %569 = vmatpush1.msra.mxu0 0.0
    %570 = vmatprep.subr.mxu0 0.0
    %571 = vmatpush1.msra.mxu0 0.0
    %572 = vmatprep.subr.mxu0 0.0
    %573 = vmatpush1.msra.mxu0 0.0
    %574 = vmatprep.subr.mxu0 0.0
    %575 = vmatpush1.msra.mxu0 0.0
    %576 = vmatprep.subr.mxu0 0.0
    %577 = vmatpush1.msra.mxu0 0.0
    %578 = vmatprep.subr.mxu0 0.0
    %579 = vmatpush1.msra.mxu0 0.0
    %580 = vmatprep.subr.mxu0 0.0
    %581 = vmatpush1.msra.mxu0 0.0
    %582 = vmatprep.subr.mxu0 0.0
    %583 = vmatpush1.msra.mxu0 0.0
    %584 = vmatprep.subr.mxu0 0.0
    %585 = vmatpush1.msra.mxu0 0.0
    %586 = vmatprep.subr.mxu0 0.0
    %587 = vmatpush1.msra.mxu0 0.0
    %588 = vmatprep.subr.mxu0 0.0
    %589 = vmatpush1.msra.mxu0 0.0
    %590 = vmatprep.subr.mxu0 0.0
    %591 = vmatpush1.msra.mxu0 0.0
    %592 = vmatprep.subr.mxu0 0.0
    %593 = vmatpush1.msra.mxu0 0.0
    %594 = vmatprep.subr.mxu0 0.0
    %595 = vmatpush1.msra.mxu0 0.0
    %596 = vmatprep.subr.mxu0 0.0
    %597 = vmatpush1.msra.mxu0 0.0
    %598 = vmatprep.subr.mxu0 0.0
    %599 = vmatpush1.msra.mxu0 %v543
    %600 = vmatprep.subr.mxu0 0.0
    %601 = vmatpush2.msra.mxu0 0.0
    %602 = vmatprep.subr.mxu0 0.0
    %603 = vmatpush2.msra.mxu0 0.0
    %604 = vmatprep.subr.mxu0 0.0
    %605 = vmatpush2.msra.mxu0 0.0
    %606 = vmatprep.subr.mxu0 0.0
    %607 = vmatpush2.msra.mxu0 0.0
    %608 = vmatprep.subr.mxu0 0.0
    %609 = vmatpush2.msra.mxu0 0.0
    %610 = vmatprep.subr.mxu0 0.0
    %611 = vmatpush2.msra.mxu0 0.0
    %612 = vmatprep.subr.mxu0 0.0
    %613 = vmatpush2.msra.mxu0 0.0
    %614 = vmatprep.subr.mxu0 0.0
    %615 = vmatpush2.msra.mxu0 0.0
    %616 = vmatprep.subr.mxu0 0.0
    %617 = vmatpush2.msra.mxu0 0.0
    %618 = vmatprep.subr.mxu0 0.0
    %619 = vmatpush2.msra.mxu0 0.0
    %620 = vmatprep.subr.mxu0 0.0
    %621 = vmatpush2.msra.mxu0 0.0
    %622 = vmatprep.subr.mxu0 0.0
    %623 = vmatpush2.msra.mxu0 0.0
    %624 = vmatprep.subr.mxu0 0.0
    %625 = vmatpush2.msra.mxu0 0.0
    %626 = vmatprep.subr.mxu0 0.0
    %627 = vmatpush2.msra.mxu0 0.0
    %628 = vmatprep.subr.mxu0 0.0
    %629 = vmatpush2.msra.mxu0 0.0
    %630 = vmatprep.subr.mxu0 0.0
    %631 = vmatpush2.msra.mxu0 0.0
    %632 = vmatprep.mubr.f32.mxu0 0.0
    %633 = vmatmul.mubr.f32.gmra.mxu0 %v545
    %v634 = vpop.f32.mrf.mxu0
    %v635 = vadd.f32 0.0, %v634
    %v636 = vpop.f32.mrf.mxu0
    %637 = vmatprep.mubr.f32.mxu0 0.0
    %638 = vmatmul.mubr.f32.gmra.mxu0 %v548
    %v639 = vpop.f32.mrf.mxu0
    %v640 = vadd.f32 0.0, %v639
    %v641 = vpop.f32.mrf.mxu0
    %642 = vmatprep.mubr.f32.mxu0 0.0
    %643 = vmatmul.mubr.f32.gmra.mxu0 %v551
    %v644 = vpop.f32.mrf.mxu0
    %v645 = vadd.f32 0.0, %v644
    %v646 = vpop.f32.mrf.mxu0
    %647 = vmatprep.mubr.f32.mxu0 0.0
    %648 = vmatmul.mubr.f32.gmra.mxu0 %v554
    %v649 = vpop.f32.mrf.mxu0
    %v650 = vadd.f32 0.0, %v649
    %v651 = vpop.f32.mrf.mxu0
    %652 = vmatprep.mubr.f32.mxu0 0.0
    %653 = vmatmul.mubr.f32.gmra.mxu0 %v557
    %v654 = vpop.f32.mrf.mxu0
    %v655 = vadd.f32 0.0, %v654
    %v656 = vpop.f32.mrf.mxu0
    %657 = vmatprep.mubr.f32.mxu0 0.0
    %658 = vmatmul.mubr.f32.gmra.mxu0 %v560
    %v659 = vpop.f32.mrf.mxu0
    %v660 = vadd.f32 0.0, %v659
    %v661 = vpop.f32.mrf.mxu0
    %662 = vmatprep.mubr.f32.mxu0 0.0
    %663 = vmatmul.mubr.f32.gmra.mxu0 %v563
    %v664 = vpop.f32.mrf.mxu0
    %v665 = vadd.f32 0.0, %v664
    %v666 = vpop.f32.mrf.mxu0
    %667 = vmatprep.mubr.f32.mxu0 0.0
    %668 = vmatmul.mubr.f32.gmra.mxu0 %v566
    %v669 = vpop.f32.mrf.mxu0
    %v670 = vadd.f32 0.0, %v669
    %v671 = vpop.f32.mrf.mxu0
    %672 = vdwg.mxu0
    %vm673 = vcmask 261120
    %v675 = vsel %vm673, %v505, 0
    %v678 = vsel %vm673, %v510, 0
    %v681 = vsel %vm673, %v515, 0
    %v684 = vsel %vm673, %v520, 0
    %v687 = vsel %vm673, %v525, 0
    %v690 = vsel %vm673, %v530, 0
    %v693 = vsel %vm673, %v535, 0
    %v696 = vsel %vm673, %v540, 0
    %698 = vmatprep.subr.mxu0 0.0
    %699 = vmatpush1.msra.mxu0 0.0
    %700 = vmatprep.subr.mxu0 0.0
    %701 = vmatpush1.msra.mxu0 0.0
    %702 = vmatprep.subr.mxu0 0.0
    %703 = vmatpush1.msra.mxu0 0.0
    %704 = vmatprep.subr.mxu0 0.0
    %705 = vmatpush1.msra.mxu0 0.0
    %706 = vmatprep.subr.mxu0 0.0
    %707 = vmatpush1.msra.mxu0 0.0
    %708 = vmatprep.subr.mxu0 0.0
    %709 = vmatpush1.msra.mxu0 0.0
    %710 = vmatprep.subr.mxu0 0.0
    %711 = vmatpush1.msra.mxu0 0.0
    %712 = vmatprep.subr.mxu0 0.0
    %713 = vmatpush1.msra.mxu0 0.0
    %714 = vmatprep.subr.mxu0 0.0
    %715 = vmatpush1.msra.mxu0 0.0
    %716 = vmatprep.subr.mxu0 0.0
    %717 = vmatpush1.msra.mxu0 0.0
    %718 = vmatprep.subr.mxu0 0.0
    %719 = vmatpush1.msra.mxu0 0.0
    %720 = vmatprep.subr.mxu0 0.0
    %721 = vmatpush1.msra.mxu0 0.0
    %722 = vmatprep.subr.mxu0 %v293
    %723 = vmatpush1.msra.mxu0 %v292
    %724 = vmatprep.subr.mxu0 %v285
    %725 = vmatpush1.msra.mxu0 %v284
    %726 = vmatprep.subr.mxu0 %v277
    %727 = vmatpush1.msra.mxu0 %v276
    %728 = vmatprep.subr.mxu0 %v269
    %729 = vmatpush1.msra.mxu0 %v268
    %730 = vmatprep.subr.mxu0 0.0
    %731 = vmatpush2.msra.mxu0 0.0
    %732 = vmatprep.subr.mxu0 0.0
    %733 = vmatpush2.msra.mxu0 0.0
    %734 = vmatprep.subr.mxu0 0.0
    %735 = vmatpush2.msra.mxu0 0.0
    %736 = vmatprep.subr.mxu0 0.0
    %737 = vmatpush2.msra.mxu0 0.0
    %738 = vmatprep.subr.mxu0 0.0
    %739 = vmatpush2.msra.mxu0 0.0
    %740 = vmatprep.subr.mxu0 0.0
    %741 = vmatpush2.msra.mxu0 0.0
    %742 = vmatprep.subr.mxu0 0.0
    %743 = vmatpush2.msra.mxu0 0.0
    %744 = vmatprep.subr.mxu0 0.0
    %745 = vmatpush2.msra.mxu0 0.0
    %746 = vmatprep.subr.mxu0 0.0
    %747 = vmatpush2.msra.mxu0 0.0
    %748 = vmatprep.subr.mxu0 0.0
    %749 = vmatpush2.msra.mxu0 0.0
    %750 = vmatprep.subr.mxu0 0.0
    %751 = vmatpush2.msra.mxu0 0.0
    %752 = vmatprep.subr.mxu0 0.0
    %753 = vmatpush2.msra.mxu0 0.0
    %754 = vmatprep.subr.mxu0 0.0
    %755 = vmatpush2.msra.mxu0 0.0
    %756 = vmatprep.subr.mxu0 0.0
    %757 = vmatpush2.msra.mxu0 0.0
    %758 = vmatprep.subr.mxu0 0.0
    %759 = vmatpush2.msra.mxu0 0.0
    %760 = vmatprep.subr.mxu0 0.0
    %761 = vmatpush2.msra.mxu0 0.0
    %762 = vmatprep.mubr.f32.mxu0 0.0
    %763 = vmatmul.mubr.f32.gmra.mxu0 %v675
    %v764 = vpop.f32.mrf.mxu0
    %v765 = vadd.f32 0.0, %v764
    %v766 = vpop.f32.mrf.mxu0
    %v767 = vadd.f32 0.0, %v766
    %768 = vmatprep.mubr.f32.mxu0 0.0
    %769 = vmatmul.mubr.f32.gmra.mxu0 %v678
    %v770 = vpop.f32.mrf.mxu0
    %v771 = vadd.f32 0.0, %v770
    %v772 = vpop.f32.mrf.mxu0
    %v773 = vadd.f32 0.0, %v772
    %774 = vmatprep.mubr.f32.mxu0 0.0
    %775 = vmatmul.mubr.f32.gmra.mxu0 %v681
    %v776 = vpop.f32.mrf.mxu0
    %v777 = vadd.f32 0.0, %v776
    %v778 = vpop.f32.mrf.mxu0
    %v779 = vadd.f32 0.0, %v778
    %780 = vmatprep.mubr.f32.mxu0 0.0
    %781 = vmatmul.mubr.f32.gmra.mxu0 %v684
    %v782 = vpop.f32.mrf.mxu0
    %v783 = vadd.f32 0.0, %v782
    %v784 = vpop.f32.mrf.mxu0
    %v785 = vadd.f32 0.0, %v784
    %786 = vmatprep.mubr.f32.mxu0 0.0
    %787 = vmatmul.mubr.f32.gmra.mxu0 %v687
    %v788 = vpop.f32.mrf.mxu0
    %v789 = vadd.f32 0.0, %v788
    %v790 = vpop.f32.mrf.mxu0
    %v791 = vadd.f32 0.0, %v790
    %792 = vmatprep.mubr.f32.mxu0 0.0
    %793 = vmatmul.mubr.f32.gmra.mxu0 %v690
    %v794 = vpop.f32.mrf.mxu0
    %v795 = vadd.f32 0.0, %v794
    %v796 = vpop.f32.mrf.mxu0
    %v797 = vadd.f32 0.0, %v796
    %798 = vmatprep.mubr.f32.mxu0 0.0
    %799 = vmatmul.mubr.f32.gmra.mxu0 %v693
    %v800 = vpop.f32.mrf.mxu0
    %v801 = vadd.f32 0.0, %v800
    %v802 = vpop.f32.mrf.mxu0
    %v803 = vadd.f32 0.0, %v802
    %804 = vmatprep.mubr.f32.mxu0 0.0
    %805 = vmatmul.mubr.f32.gmra.mxu0 %v696
    %v806 = vpop.f32.mrf.mxu0
    %v807 = vadd.f32 0.0, %v806
    %v808 = vpop.f32.mrf.mxu0
    %v809 = vadd.f32 0.0, %v808
    %810 = vdwg.mxu0
    %811 = vmatprep.subr.mxu0 0.0
    %812 = vmatpush1.msra.mxu0 0.0
    %813 = vmatprep.subr.mxu0 0.0
    %814 = vmatpush1.msra.mxu0 0.0
    %815 = vmatprep.subr.mxu0 0.0
    %816 = vmatpush1.msra.mxu0 0.0
    %817 = vmatprep.subr.mxu0 0.0
    %818 = vmatpush1.msra.mxu0 0.0
    %819 = vmatprep.subr.mxu0 0.0
    %820 = vmatpush1.msra.mxu0 0.0
    %821 = vmatprep.subr.mxu0 0.0
    %822 = vmatpush1.msra.mxu0 0.0
    %823 = vmatprep.subr.mxu0 0.0
    %824 = vmatpush1.msra.mxu0 0.0
    %825 = vmatprep.subr.mxu0 0.0
    %826 = vmatpush1.msra.mxu0 0.0
    %827 = vmatprep.subr.mxu0 0.0
    %828 = vmatpush1.msra.mxu0 0.0
    %829 = vmatprep.subr.mxu0 0.0
    %830 = vmatpush1.msra.mxu0 0.0
    %831 = vmatprep.subr.mxu0 0.0
    %832 = vmatpush1.msra.mxu0 0.0
    %833 = vmatprep.subr.mxu0 0.0
    %834 = vmatpush1.msra.mxu0 0.0
    %835 = vmatprep.subr.mxu0 %v295
    %836 = vmatpush1.msra.mxu0 %v294
    %837 = vmatprep.subr.mxu0 %v287
    %838 = vmatpush1.msra.mxu0 %v286
    %839 = vmatprep.subr.mxu0 %v279
    %840 = vmatpush1.msra.mxu0 %v278
    %841 = vmatprep.subr.mxu0 %v271
    %842 = vmatpush1.msra.mxu0 %v270
    %843 = vmatprep.subr.mxu0 0.0
    %844 = vmatpush2.msra.mxu0 0.0
    %845 = vmatprep.subr.mxu0 0.0
    %846 = vmatpush2.msra.mxu0 0.0
    %847 = vmatprep.subr.mxu0 0.0
    %848 = vmatpush2.msra.mxu0 0.0
    %849 = vmatprep.subr.mxu0 0.0
    %850 = vmatpush2.msra.mxu0 0.0
    %851 = vmatprep.subr.mxu0 0.0
    %852 = vmatpush2.msra.mxu0 0.0
    %853 = vmatprep.subr.mxu0 0.0
    %854 = vmatpush2.msra.mxu0 0.0
    %855 = vmatprep.subr.mxu0 0.0
    %856 = vmatpush2.msra.mxu0 0.0
    %857 = vmatprep.subr.mxu0 0.0
    %858 = vmatpush2.msra.mxu0 0.0
    %859 = vmatprep.subr.mxu0 0.0
    %860 = vmatpush2.msra.mxu0 0.0
    %861 = vmatprep.subr.mxu0 0.0
    %862 = vmatpush2.msra.mxu0 0.0
    %863 = vmatprep.subr.mxu0 0.0
    %864 = vmatpush2.msra.mxu0 0.0
    %865 = vmatprep.subr.mxu0 0.0
    %866 = vmatpush2.msra.mxu0 0.0
    %867 = vmatprep.subr.mxu0 0.0
    %868 = vmatpush2.msra.mxu0 0.0
    %869 = vmatprep.subr.mxu0 0.0
    %870 = vmatpush2.msra.mxu0 0.0
    %871 = vmatprep.subr.mxu0 0.0
    %872 = vmatpush2.msra.mxu0 0.0
    %873 = vmatprep.subr.mxu0 0.0
    %874 = vmatpush2.msra.mxu0 0.0
    %875 = vmatprep.mubr.f32.mxu0 0.0
    %876 = vmatmul.mubr.f32.gmra.mxu0 %v675
    %v877 = vpop.f32.mrf.mxu0
    %v878 = vadd.f32 0.0, %v877
    %v879 = vpop.f32.mrf.mxu0
    %v880 = vadd.f32 0.0, %v879
    %881 = vmatprep.mubr.f32.mxu0 0.0
    %882 = vmatmul.mubr.f32.gmra.mxu0 %v678
    %v883 = vpop.f32.mrf.mxu0
    %v884 = vadd.f32 0.0, %v883
    %v885 = vpop.f32.mrf.mxu0
    %v886 = vadd.f32 0.0, %v885
    %887 = vmatprep.mubr.f32.mxu0 0.0
    %888 = vmatmul.mubr.f32.gmra.mxu0 %v681
    %v889 = vpop.f32.mrf.mxu0
    %v890 = vadd.f32 0.0, %v889
    %v891 = vpop.f32.mrf.mxu0
    %v892 = vadd.f32 0.0, %v891
    %893 = vmatprep.mubr.f32.mxu0 0.0
    %894 = vmatmul.mubr.f32.gmra.mxu0 %v684
    %v895 = vpop.f32.mrf.mxu0
    %v896 = vadd.f32 0.0, %v895
    %v897 = vpop.f32.mrf.mxu0
    %v898 = vadd.f32 0.0, %v897
    %899 = vmatprep.mubr.f32.mxu0 0.0
    %900 = vmatmul.mubr.f32.gmra.mxu0 %v687
    %v901 = vpop.f32.mrf.mxu0
    %v902 = vadd.f32 0.0, %v901
    %v903 = vpop.f32.mrf.mxu0
    %v904 = vadd.f32 0.0, %v903
    %905 = vmatprep.mubr.f32.mxu0 0.0
    %906 = vmatmul.mubr.f32.gmra.mxu0 %v690
    %v907 = vpop.f32.mrf.mxu0
    %v908 = vadd.f32 0.0, %v907
    %v909 = vpop.f32.mrf.mxu0
    %v910 = vadd.f32 0.0, %v909
    %911 = vmatprep.mubr.f32.mxu0 0.0
    %912 = vmatmul.mubr.f32.gmra.mxu0 %v693
    %v913 = vpop.f32.mrf.mxu0
    %v914 = vadd.f32 0.0, %v913
    %v915 = vpop.f32.mrf.mxu0
    %v916 = vadd.f32 0.0, %v915
    %917 = vmatprep.mubr.f32.mxu0 0.0
    %918 = vmatmul.mubr.f32.gmra.mxu0 %v696
    %v919 = vpop.f32.mrf.mxu0
    %v920 = vadd.f32 0.0, %v919
    %v921 = vpop.f32.mrf.mxu0
    %v922 = vadd.f32 0.0, %v921
    %923 = vdwg.mxu0
    %924 = vmatprep.subr.mxu0 0.0
    %925 = vmatpush1.msra.mxu0 0.0
    %926 = vmatprep.subr.mxu0 0.0
    %927 = vmatpush1.msra.mxu0 0.0
    %928 = vmatprep.subr.mxu0 0.0
    %929 = vmatpush1.msra.mxu0 0.0
    %930 = vmatprep.subr.mxu0 0.0
    %931 = vmatpush1.msra.mxu0 0.0
    %932 = vmatprep.subr.mxu0 0.0
    %933 = vmatpush1.msra.mxu0 0.0
    %934 = vmatprep.subr.mxu0 0.0
    %935 = vmatpush1.msra.mxu0 0.0
    %936 = vmatprep.subr.mxu0 0.0
    %937 = vmatpush1.msra.mxu0 0.0
    %938 = vmatprep.subr.mxu0 0.0
    %939 = vmatpush1.msra.mxu0 0.0
    %940 = vmatprep.subr.mxu0 0.0
    %941 = vmatpush1.msra.mxu0 0.0
    %942 = vmatprep.subr.mxu0 0.0
    %943 = vmatpush1.msra.mxu0 0.0
    %944 = vmatprep.subr.mxu0 0.0
    %945 = vmatpush1.msra.mxu0 0.0
    %946 = vmatprep.subr.mxu0 0.0
    %947 = vmatpush1.msra.mxu0 0.0
    %948 = vmatprep.subr.mxu0 %v297
    %949 = vmatpush1.msra.mxu0 %v296
    %950 = vmatprep.subr.mxu0 %v289
    %951 = vmatpush1.msra.mxu0 %v288
    %952 = vmatprep.subr.mxu0 %v281
    %953 = vmatpush1.msra.mxu0 %v280
    %954 = vmatprep.subr.mxu0 %v273
    %955 = vmatpush1.msra.mxu0 %v272
    %956 = vmatprep.subr.mxu0 0.0
    %957 = vmatpush2.msra.mxu0 0.0
    %958 = vmatprep.subr.mxu0 0.0
    %959 = vmatpush2.msra.mxu0 0.0
    %960 = vmatprep.subr.mxu0 0.0
    %961 = vmatpush2.msra.mxu0 0.0
    %962 = vmatprep.subr.mxu0 0.0
    %963 = vmatpush2.msra.mxu0 0.0
    %964 = vmatprep.subr.mxu0 0.0
    %965 = vmatpush2.msra.mxu0 0.0
    %966 = vmatprep.subr.mxu0 0.0
    %967 = vmatpush2.msra.mxu0 0.0
    %968 = vmatprep.subr.mxu0 0.0
    %969 = vmatpush2.msra.mxu0 0.0
    %970 = vmatprep.subr.mxu0 0.0
    %971 = vmatpush2.msra.mxu0 0.0
    %972 = vmatprep.subr.mxu0 0.0
    %973 = vmatpush2.msra.mxu0 0.0
    %974 = vmatprep.subr.mxu0 0.0
    %975 = vmatpush2.msra.mxu0 0.0
    %976 = vmatprep.subr.mxu0 0.0
    %977 = vmatpush2.msra.mxu0 0.0
    %978 = vmatprep.subr.mxu0 0.0
    %979 = vmatpush2.msra.mxu0 0.0
    %980 = vmatprep.subr.mxu0 0.0
    %981 = vmatpush2.msra.mxu0 0.0
    %982 = vmatprep.subr.mxu0 0.0
    %983 = vmatpush2.msra.mxu0 0.0
    %984 = vmatprep.subr.mxu0 0.0
    %985 = vmatpush2.msra.mxu0 0.0
    %986 = vmatprep.subr.mxu0 0.0
    %987 = vmatpush2.msra.mxu0 0.0
    %988 = vmatprep.mubr.f32.mxu0 0.0
    %989 = vmatmul.mubr.f32.gmra.mxu0 %v675
    %v990 = vpop.f32.mrf.mxu0
    %v991 = vadd.f32 0.0, %v990
    %v992 = vpop.f32.mrf.mxu0
    %v993 = vadd.f32 0.0, %v992
    %994 = vmatprep.mubr.f32.mxu0 0.0
    %995 = vmatmul.mubr.f32.gmra.mxu0 %v678
    %v996 = vpop.f32.mrf.mxu0
    %v997 = vadd.f32 0.0, %v996
    %v998 = vpop.f32.mrf.mxu0
    %v999 = vadd.f32 0.0, %v998
    %1000 = vmatprep.mubr.f32.mxu0 0.0
    %1001 = vmatmul.mubr.f32.gmra.mxu0 %v681
    %v1002 = vpop.f32.mrf.mxu0
    %v1003 = vadd.f32 0.0, %v1002
    %v1004 = vpop.f32.mrf.mxu0
    %v1005 = vadd.f32 0.0, %v1004
    %1006 = vmatprep.mubr.f32.mxu0 0.0
    %1007 = vmatmul.mubr.f32.gmra.mxu0 %v684
    %v1008 = vpop.f32.mrf.mxu0
    %v1009 = vadd.f32 0.0, %v1008
    %v1010 = vpop.f32.mrf.mxu0
    %v1011 = vadd.f32 0.0, %v1010
    %1012 = vmatprep.mubr.f32.mxu0 0.0
    %1013 = vmatmul.mubr.f32.gmra.mxu0 %v687
    %v1014 = vpop.f32.mrf.mxu0
    %v1015 = vadd.f32 0.0, %v1014
    %v1016 = vpop.f32.mrf.mxu0
    %v1017 = vadd.f32 0.0, %v1016
    %1018 = vmatprep.mubr.f32.mxu0 0.0
    %1019 = vmatmul.mubr.f32.gmra.mxu0 %v690
    %v1020 = vpop.f32.mrf.mxu0
    %v1021 = vadd.f32 0.0, %v1020
    %v1022 = vpop.f32.mrf.mxu0
    %v1023 = vadd.f32 0.0, %v1022
    %1024 = vmatprep.mubr.f32.mxu0 0.0
    %1025 = vmatmul.mubr.f32.gmra.mxu0 %v693
    %v1026 = vpop.f32.mrf.mxu0
    %v1027 = vadd.f32 0.0, %v1026
    %v1028 = vpop.f32.mrf.mxu0
    %v1029 = vadd.f32 0.0, %v1028
    %1030 = vmatprep.mubr.f32.mxu0 0.0
    %1031 = vmatmul.mubr.f32.gmra.mxu0 %v696
    %v1032 = vpop.f32.mrf.mxu0
    %v1033 = vadd.f32 0.0, %v1032
    %v1034 = vpop.f32.mrf.mxu0
    %v1035 = vadd.f32 0.0, %v1034
    %1036 = vdwg.mxu0
    %1037 = vmatprep.subr.mxu0 0.0
    %1038 = vmatpush1.msra.mxu0 0.0
    %1039 = vmatprep.subr.mxu0 0.0
    %1040 = vmatpush1.msra.mxu0 0.0
    %1041 = vmatprep.subr.mxu0 0.0
    %1042 = vmatpush1.msra.mxu0 0.0
    %1043 = vmatprep.subr.mxu0 0.0
    %1044 = vmatpush1.msra.mxu0 0.0
    %1045 = vmatprep.subr.mxu0 0.0
    %1046 = vmatpush1.msra.mxu0 0.0
    %1047 = vmatprep.subr.mxu0 0.0
    %1048 = vmatpush1.msra.mxu0 0.0
    %1049 = vmatprep.subr.mxu0 0.0
    %1050 = vmatpush1.msra.mxu0 0.0
    %1051 = vmatprep.subr.mxu0 0.0
    %1052 = vmatpush1.msra.mxu0 0.0
    %1053 = vmatprep.subr.mxu0 0.0
    %1054 = vmatpush1.msra.mxu0 0.0
    %1055 = vmatprep.subr.mxu0 0.0
    %1056 = vmatpush1.msra.mxu0 0.0
    %1057 = vmatprep.subr.mxu0 0.0
    %1058 = vmatpush1.msra.mxu0 0.0
    %1059 = vmatprep.subr.mxu0 0.0
    %1060 = vmatpush1.msra.mxu0 0.0
    %1061 = vmatprep.subr.mxu0 %v299
    %1062 = vmatpush1.msra.mxu0 %v298
    %1063 = vmatprep.subr.mxu0 %v291
    %1064 = vmatpush1.msra.mxu0 %v290
    %1065 = vmatprep.subr.mxu0 %v283
    %1066 = vmatpush1.msra.mxu0 %v282
    %1067 = vmatprep.subr.mxu0 %v275
    %1068 = vmatpush1.msra.mxu0 %v274
    %1069 = vmatprep.subr.mxu0 0.0
    %1070 = vmatpush2.msra.mxu0 0.0
    %1071 = vmatprep.subr.mxu0 0.0
    %1072 = vmatpush2.msra.mxu0 0.0
    %1073 = vmatprep.subr.mxu0 0.0
    %1074 = vmatpush2.msra.mxu0 0.0
    %1075 = vmatprep.subr.mxu0 0.0
    %1076 = vmatpush2.msra.mxu0 0.0
    %1077 = vmatprep.subr.mxu0 0.0
    %1078 = vmatpush2.msra.mxu0 0.0
    %1079 = vmatprep.subr.mxu0 0.0
    %1080 = vmatpush2.msra.mxu0 0.0
    %1081 = vmatprep.subr.mxu0 0.0
    %1082 = vmatpush2.msra.mxu0 0.0
    %1083 = vmatprep.subr.mxu0 0.0
    %1084 = vmatpush2.msra.mxu0 0.0
    %1085 = vmatprep.subr.mxu0 0.0
    %1086 = vmatpush2.msra.mxu0 0.0
    %1087 = vmatprep.subr.mxu0 0.0
    %1088 = vmatpush2.msra.mxu0 0.0
    %1089 = vmatprep.subr.mxu0 0.0
    %1090 = vmatpush2.msra.mxu0 0.0
    %1091 = vmatprep.subr.mxu0 0.0
    %1092 = vmatpush2.msra.mxu0 0.0
    %1093 = vmatprep.subr.mxu0 0.0
    %1094 = vmatpush2.msra.mxu0 0.0
    %1095 = vmatprep.subr.mxu0 0.0
    %1096 = vmatpush2.msra.mxu0 0.0
    %1097 = vmatprep.subr.mxu0 0.0
    %1098 = vmatpush2.msra.mxu0 0.0
    %1099 = vmatprep.subr.mxu0 0.0
    %1100 = vmatpush2.msra.mxu0 0.0
    %1101 = vmatprep.mubr.f32.mxu0 0.0
    %1102 = vmatmul.mubr.f32.gmra.mxu0 %v675
    %v1103 = vpop.f32.mrf.mxu0
    %v1104 = vadd.f32 0.0, %v1103
    %v1105 = vpop.f32.mrf.mxu0
    %v1106 = vadd.f32 0.0, %v1105
    %1107 = vmatprep.mubr.f32.mxu0 0.0
    %1108 = vmatmul.mubr.f32.gmra.mxu0 %v678
    %v1109 = vpop.f32.mrf.mxu0
    %v1110 = vadd.f32 0.0, %v1109
    %v1111 = vpop.f32.mrf.mxu0
    %v1112 = vadd.f32 0.0, %v1111
    %1113 = vmatprep.mubr.f32.mxu0 0.0
    %1114 = vmatmul.mubr.f32.gmra.mxu0 %v681
    %v1115 = vpop.f32.mrf.mxu0
    %v1116 = vadd.f32 0.0, %v1115
    %v1117 = vpop.f32.mrf.mxu0
    %v1118 = vadd.f32 0.0, %v1117
    %1119 = vmatprep.mubr.f32.mxu0 0.0
    %1120 = vmatmul.mubr.f32.gmra.mxu0 %v684
    %v1121 = vpop.f32.mrf.mxu0
    %v1122 = vadd.f32 0.0, %v1121
    %v1123 = vpop.f32.mrf.mxu0
    %v1124 = vadd.f32 0.0, %v1123
    %1125 = vmatprep.mubr.f32.mxu0 0.0
    %1126 = vmatmul.mubr.f32.gmra.mxu0 %v687
    %v1127 = vpop.f32.mrf.mxu0
    %v1128 = vadd.f32 0.0, %v1127
    %v1129 = vpop.f32.mrf.mxu0
    %v1130 = vadd.f32 0.0, %v1129
    %1131 = vmatprep.mubr.f32.mxu0 0.0
    %1132 = vmatmul.mubr.f32.gmra.mxu0 %v690
    %v1133 = vpop.f32.mrf.mxu0
    %v1134 = vadd.f32 0.0, %v1133
    %v1135 = vpop.f32.mrf.mxu0
    %v1136 = vadd.f32 0.0, %v1135
    %1137 = vmatprep.mubr.f32.mxu0 0.0
    %1138 = vmatmul.mubr.f32.gmra.mxu0 %v693
    %v1139 = vpop.f32.mrf.mxu0
    %v1140 = vadd.f32 0.0, %v1139
    %v1141 = vpop.f32.mrf.mxu0
    %v1142 = vadd.f32 0.0, %v1141
    %1143 = vmatprep.mubr.f32.mxu0 0.0
    %1144 = vmatmul.mubr.f32.gmra.mxu0 %v696
    %v1145 = vpop.f32.mrf.mxu0
    %v1146 = vadd.f32 0.0, %v1145
    %v1147 = vpop.f32.mrf.mxu0
    %v1148 = vadd.f32 0.0, %v1147
    %1149 = vdwg.mxu0
    %v1151 = vsel %vm673, %v635, 0
    %v1154 = vsel %vm673, %v640, 0
    %v1157 = vsel %vm673, %v645, 0
    %v1160 = vsel %vm673, %v650, 0
    %v1163 = vsel %vm673, %v655, 0
    %v1166 = vsel %vm673, %v660, 0
    %v1169 = vsel %vm673, %v665, 0
    %v1172 = vsel %vm673, %v670, 0
    %1174 = vmatprep.subr.mxu0 0.0
    %1175 = vmatpush1.msra.mxu0 0.0
    %1176 = vmatprep.subr.mxu0 0.0
    %1177 = vmatpush1.msra.mxu0 0.0
    %1178 = vmatprep.subr.mxu0 0.0
    %1179 = vmatpush1.msra.mxu0 0.0
    %1180 = vmatprep.subr.mxu0 0.0
    %1181 = vmatpush1.msra.mxu0 0.0
    %1182 = vmatprep.subr.mxu0 0.0
    %1183 = vmatpush1.msra.mxu0 0.0
    %1184 = vmatprep.subr.mxu0 0.0
    %1185 = vmatpush1.msra.mxu0 0.0
    %1186 = vmatprep.subr.mxu0 0.0
    %1187 = vmatpush1.msra.mxu0 0.0
    %1188 = vmatprep.subr.mxu0 0.0
    %1189 = vmatpush1.msra.mxu0 0.0
    %1190 = vmatprep.subr.mxu0 0.0
    %1191 = vmatpush1.msra.mxu0 0.0
    %1192 = vmatprep.subr.mxu0 0.0
    %1193 = vmatpush1.msra.mxu0 0.0
    %1194 = vmatprep.subr.mxu0 0.0
    %1195 = vmatpush1.msra.mxu0 0.0
    %1196 = vmatprep.subr.mxu0 0.0
    %1197 = vmatpush1.msra.mxu0 0.0
    %1198 = vmatprep.subr.mxu0 %v405
    %1199 = vmatpush1.msra.mxu0 %v404
    %1200 = vmatprep.subr.mxu0 %v397
    %1201 = vmatpush1.msra.mxu0 %v396
    %1202 = vmatprep.subr.mxu0 %v389
    %1203 = vmatpush1.msra.mxu0 %v388
    %1204 = vmatprep.subr.mxu0 %v381
    %1205 = vmatpush1.msra.mxu0 %v380
    %1206 = vmatprep.subr.mxu0 0.0
    %1207 = vmatpush2.msra.mxu0 0.0
    %1208 = vmatprep.subr.mxu0 0.0
    %1209 = vmatpush2.msra.mxu0 0.0
    %1210 = vmatprep.subr.mxu0 0.0
    %1211 = vmatpush2.msra.mxu0 0.0
    %1212 = vmatprep.subr.mxu0 0.0
    %1213 = vmatpush2.msra.mxu0 0.0
    %1214 = vmatprep.subr.mxu0 0.0
    %1215 = vmatpush2.msra.mxu0 0.0
    %1216 = vmatprep.subr.mxu0 0.0
    %1217 = vmatpush2.msra.mxu0 0.0
    %1218 = vmatprep.subr.mxu0 0.0
    %1219 = vmatpush2.msra.mxu0 0.0
    %1220 = vmatprep.subr.mxu0 0.0
    %1221 = vmatpush2.msra.mxu0 0.0
    %1222 = vmatprep.subr.mxu0 0.0
    %1223 = vmatpush2.msra.mxu0 0.0
    %1224 = vmatprep.subr.mxu0 0.0
    %1225 = vmatpush2.msra.mxu0 0.0
    %1226 = vmatprep.subr.mxu0 0.0
    %1227 = vmatpush2.msra.mxu0 0.0
    %1228 = vmatprep.subr.mxu0 0.0
    %1229 = vmatpush2.msra.mxu0 0.0
    %1230 = vmatprep.subr.mxu0 0.0
    %1231 = vmatpush2.msra.mxu0 0.0
    %1232 = vmatprep.subr.mxu0 0.0
    %1233 = vmatpush2.msra.mxu0 0.0
    %1234 = vmatprep.subr.mxu0 0.0
    %1235 = vmatpush2.msra.mxu0 0.0
    %1236 = vmatprep.subr.mxu0 0.0
    %1237 = vmatpush2.msra.mxu0 0.0
    %1238 = vmatprep.mubr.f32.mxu0 0.0
    %1239 = vmatmul.mubr.f32.gmra.mxu0 %v1151
    %v1240 = vpop.f32.mrf.mxu0
    %v1241 = vadd.f32 0.0, %v1240
    %v1242 = vpop.f32.mrf.mxu0
    %v1243 = vadd.f32 0.0, %v1242
    %1244 = vmatprep.mubr.f32.mxu0 0.0
    %1245 = vmatmul.mubr.f32.gmra.mxu0 %v1154
    %v1246 = vpop.f32.mrf.mxu0
    %v1247 = vadd.f32 0.0, %v1246
    %v1248 = vpop.f32.mrf.mxu0
    %v1249 = vadd.f32 0.0, %v1248
    %1250 = vmatprep.mubr.f32.mxu0 0.0
    %1251 = vmatmul.mubr.f32.gmra.mxu0 %v1157
    %v1252 = vpop.f32.mrf.mxu0
    %v1253 = vadd.f32 0.0, %v1252
    %v1254 = vpop.f32.mrf.mxu0
    %v1255 = vadd.f32 0.0, %v1254
    %1256 = vmatprep.mubr.f32.mxu0 0.0
    %1257 = vmatmul.mubr.f32.gmra.mxu0 %v1160
    %v1258 = vpop.f32.mrf.mxu0
    %v1259 = vadd.f32 0.0, %v1258
    %v1260 = vpop.f32.mrf.mxu0
    %v1261 = vadd.f32 0.0, %v1260
    %1262 = vmatprep.mubr.f32.mxu0 0.0
    %1263 = vmatmul.mubr.f32.gmra.mxu0 %v1163
    %v1264 = vpop.f32.mrf.mxu0
    %v1265 = vadd.f32 0.0, %v1264
    %v1266 = vpop.f32.mrf.mxu0
    %v1267 = vadd.f32 0.0, %v1266
    %1268 = vmatprep.mubr.f32.mxu0 0.0
    %1269 = vmatmul.mubr.f32.gmra.mxu0 %v1166
    %v1270 = vpop.f32.mrf.mxu0
    %v1271 = vadd.f32 0.0, %v1270
    %v1272 = vpop.f32.mrf.mxu0
    %v1273 = vadd.f32 0.0, %v1272
    %1274 = vmatprep.mubr.f32.mxu0 0.0
    %1275 = vmatmul.mubr.f32.gmra.mxu0 %v1169
    %v1276 = vpop.f32.mrf.mxu0
    %v1277 = vadd.f32 0.0, %v1276
    %v1278 = vpop.f32.mrf.mxu0
    %v1279 = vadd.f32 0.0, %v1278
    %1280 = vmatprep.mubr.f32.mxu0 0.0
    %1281 = vmatmul.mubr.f32.gmra.mxu0 %v1172
    %v1282 = vpop.f32.mrf.mxu0
    %v1283 = vadd.f32 0.0, %v1282
    %v1284 = vpop.f32.mrf.mxu0
    %v1285 = vadd.f32 0.0, %v1284
    %1286 = vdwg.mxu0
    %1287 = vmatprep.subr.mxu0 0.0
    %1288 = vmatpush1.msra.mxu0 0.0
    %1289 = vmatprep.subr.mxu0 0.0
    %1290 = vmatpush1.msra.mxu0 0.0
    %1291 = vmatprep.subr.mxu0 0.0
    %1292 = vmatpush1.msra.mxu0 0.0
    %1293 = vmatprep.subr.mxu0 0.0
    %1294 = vmatpush1.msra.mxu0 0.0
    %1295 = vmatprep.subr.mxu0 0.0
    %1296 = vmatpush1.msra.mxu0 0.0
    %1297 = vmatprep.subr.mxu0 0.0
    %1298 = vmatpush1.msra.mxu0 0.0
    %1299 = vmatprep.subr.mxu0 0.0
    %1300 = vmatpush1.msra.mxu0 0.0
    %1301 = vmatprep.subr.mxu0 0.0
    %1302 = vmatpush1.msra.mxu0 0.0
    %1303 = vmatprep.subr.mxu0 0.0
    %1304 = vmatpush1.msra.mxu0 0.0
    %1305 = vmatprep.subr.mxu0 0.0
    %1306 = vmatpush1.msra.mxu0 0.0
    %1307 = vmatprep.subr.mxu0 0.0
    %1308 = vmatpush1.msra.mxu0 0.0
    %1309 = vmatprep.subr.mxu0 0.0
    %1310 = vmatpush1.msra.mxu0 0.0
    %1311 = vmatprep.subr.mxu0 %v407
    %1312 = vmatpush1.msra.mxu0 %v406
    %1313 = vmatprep.subr.mxu0 %v399
    %1314 = vmatpush1.msra.mxu0 %v398
    %1315 = vmatprep.subr.mxu0 %v391
    %1316 = vmatpush1.msra.mxu0 %v390
    %1317 = vmatprep.subr.mxu0 %v383
    %1318 = vmatpush1.msra.mxu0 %v382
    %1319 = vmatprep.subr.mxu0 0.0
    %1320 = vmatpush2.msra.mxu0 0.0
    %1321 = vmatprep.subr.mxu0 0.0
    %1322 = vmatpush2.msra.mxu0 0.0
    %1323 = vmatprep.subr.mxu0 0.0
    %1324 = vmatpush2.msra.mxu0 0.0
    %1325 = vmatprep.subr.mxu0 0.0
    %1326 = vmatpush2.msra.mxu0 0.0
    %1327 = vmatprep.subr.mxu0 0.0
    %1328 = vmatpush2.msra.mxu0 0.0
    %1329 = vmatprep.subr.mxu0 0.0
    %1330 = vmatpush2.msra.mxu0 0.0
    %1331 = vmatprep.subr.mxu0 0.0
    %1332 = vmatpush2.msra.mxu0 0.0
    %1333 = vmatprep.subr.mxu0 0.0
    %1334 = vmatpush2.msra.mxu0 0.0
    %1335 = vmatprep.subr.mxu0 0.0
    %1336 = vmatpush2.msra.mxu0 0.0
    %1337 = vmatprep.subr.mxu0 0.0
    %1338 = vmatpush2.msra.mxu0 0.0
    %1339 = vmatprep.subr.mxu0 0.0
    %1340 = vmatpush2.msra.mxu0 0.0
    %1341 = vmatprep.subr.mxu0 0.0
    %1342 = vmatpush2.msra.mxu0 0.0
    %1343 = vmatprep.subr.mxu0 0.0
    %1344 = vmatpush2.msra.mxu0 0.0
    %1345 = vmatprep.subr.mxu0 0.0
    %1346 = vmatpush2.msra.mxu0 0.0
    %1347 = vmatprep.subr.mxu0 0.0
    %1348 = vmatpush2.msra.mxu0 0.0
    %1349 = vmatprep.subr.mxu0 0.0
    %1350 = vmatpush2.msra.mxu0 0.0
    %1351 = vmatprep.mubr.f32.mxu0 0.0
    %1352 = vmatmul.mubr.f32.gmra.mxu0 %v1151
    %v1353 = vpop.f32.mrf.mxu0
    %v1354 = vadd.f32 0.0, %v1353
    %v1355 = vpop.f32.mrf.mxu0
    %v1356 = vadd.f32 0.0, %v1355
    %1357 = vmatprep.mubr.f32.mxu0 0.0
    %1358 = vmatmul.mubr.f32.gmra.mxu0 %v1154
    %v1359 = vpop.f32.mrf.mxu0
    %v1360 = vadd.f32 0.0, %v1359
    %v1361 = vpop.f32.mrf.mxu0
    %v1362 = vadd.f32 0.0, %v1361
    %1363 = vmatprep.mubr.f32.mxu0 0.0
    %1364 = vmatmul.mubr.f32.gmra.mxu0 %v1157
    %v1365 = vpop.f32.mrf.mxu0
    %v1366 = vadd.f32 0.0, %v1365
    %v1367 = vpop.f32.mrf.mxu0
    %v1368 = vadd.f32 0.0, %v1367
    %1369 = vmatprep.mubr.f32.mxu0 0.0
    %1370 = vmatmul.mubr.f32.gmra.mxu0 %v1160
    %v1371 = vpop.f32.mrf.mxu0
    %v1372 = vadd.f32 0.0, %v1371
    %v1373 = vpop.f32.mrf.mxu0
    %v1374 = vadd.f32 0.0, %v1373
    %1375 = vmatprep.mubr.f32.mxu0 0.0
    %1376 = vmatmul.mubr.f32.gmra.mxu0 %v1163
    %v1377 = vpop.f32.mrf.mxu0
    %v1378 = vadd.f32 0.0, %v1377
    %v1379 = vpop.f32.mrf.mxu0
    %v1380 = vadd.f32 0.0, %v1379
    %1381 = vmatprep.mubr.f32.mxu0 0.0
    %1382 = vmatmul.mubr.f32.gmra.mxu0 %v1166
    %v1383 = vpop.f32.mrf.mxu0
    %v1384 = vadd.f32 0.0, %v1383
    %v1385 = vpop.f32.mrf.mxu0
    %v1386 = vadd.f32 0.0, %v1385
    %1387 = vmatprep.mubr.f32.mxu0 0.0
    %1388 = vmatmul.mubr.f32.gmra.mxu0 %v1169
    %v1389 = vpop.f32.mrf.mxu0
    %v1390 = vadd.f32 0.0, %v1389
    %v1391 = vpop.f32.mrf.mxu0
    %v1392 = vadd.f32 0.0, %v1391
    %1393 = vmatprep.mubr.f32.mxu0 0.0
    %1394 = vmatmul.mubr.f32.gmra.mxu0 %v1172
    %v1395 = vpop.f32.mrf.mxu0
    %v1396 = vadd.f32 0.0, %v1395
    %v1397 = vpop.f32.mrf.mxu0
    %v1398 = vadd.f32 0.0, %v1397
    %1399 = vdwg.mxu0
    %1400 = vmatprep.subr.mxu0 0.0
    %1401 = vmatpush1.msra.mxu0 0.0
    %1402 = vmatprep.subr.mxu0 0.0
    %1403 = vmatpush1.msra.mxu0 0.0
    %1404 = vmatprep.subr.mxu0 0.0
    %1405 = vmatpush1.msra.mxu0 0.0
    %1406 = vmatprep.subr.mxu0 0.0
    %1407 = vmatpush1.msra.mxu0 0.0
    %1408 = vmatprep.subr.mxu0 0.0
    %1409 = vmatpush1.msra.mxu0 0.0
    %1410 = vmatprep.subr.mxu0 0.0
    %1411 = vmatpush1.msra.mxu0 0.0
    %1412 = vmatprep.subr.mxu0 0.0
    %1413 = vmatpush1.msra.mxu0 0.0
    %1414 = vmatprep.subr.mxu0 0.0
    %1415 = vmatpush1.msra.mxu0 0.0
    %1416 = vmatprep.subr.mxu0 0.0
    %1417 = vmatpush1.msra.mxu0 0.0
    %1418 = vmatprep.subr.mxu0 0.0
    %1419 = vmatpush1.msra.mxu0 0.0
    %1420 = vmatprep.subr.mxu0 0.0
    %1421 = vmatpush1.msra.mxu0 0.0
    %1422 = vmatprep.subr.mxu0 0.0
    %1423 = vmatpush1.msra.mxu0 0.0
    %1424 = vmatprep.subr.mxu0 %v409
    %1425 = vmatpush1.msra.mxu0 %v408
    %1426 = vmatprep.subr.mxu0 %v401
    %1427 = vmatpush1.msra.mxu0 %v400
    %1428 = vmatprep.subr.mxu0 %v393
    %1429 = vmatpush1.msra.mxu0 %v392
    %1430 = vmatprep.subr.mxu0 %v385
    %1431 = vmatpush1.msra.mxu0 %v384
    %1432 = vmatprep.subr.mxu0 0.0
    %1433 = vmatpush2.msra.mxu0 0.0
    %1434 = vmatprep.subr.mxu0 0.0
    %1435 = vmatpush2.msra.mxu0 0.0
    %1436 = vmatprep.subr.mxu0 0.0
    %1437 = vmatpush2.msra.mxu0 0.0
    %1438 = vmatprep.subr.mxu0 0.0
    %1439 = vmatpush2.msra.mxu0 0.0
    %1440 = vmatprep.subr.mxu0 0.0
    %1441 = vmatpush2.msra.mxu0 0.0
    %1442 = vmatprep.subr.mxu0 0.0
    %1443 = vmatpush2.msra.mxu0 0.0
    %1444 = vmatprep.subr.mxu0 0.0
    %1445 = vmatpush2.msra.mxu0 0.0
    %1446 = vmatprep.subr.mxu0 0.0
    %1447 = vmatpush2.msra.mxu0 0.0
    %1448 = vmatprep.subr.mxu0 0.0
    %1449 = vmatpush2.msra.mxu0 0.0
    %1450 = vmatprep.subr.mxu0 0.0
    %1451 = vmatpush2.msra.mxu0 0.0
    %1452 = vmatprep.subr.mxu0 0.0
    %1453 = vmatpush2.msra.mxu0 0.0
    %1454 = vmatprep.subr.mxu0 0.0
    %1455 = vmatpush2.msra.mxu0 0.0
    %1456 = vmatprep.subr.mxu0 0.0
    %1457 = vmatpush2.msra.mxu0 0.0
    %1458 = vmatprep.subr.mxu0 0.0
    %1459 = vmatpush2.msra.mxu0 0.0
    %1460 = vmatprep.subr.mxu0 0.0
    %1461 = vmatpush2.msra.mxu0 0.0
    %1462 = vmatprep.subr.mxu0 0.0
    %1463 = vmatpush2.msra.mxu0 0.0
    %1464 = vmatprep.mubr.f32.mxu0 0.0
    %1465 = vmatmul.mubr.f32.gmra.mxu0 %v1151
    %v1466 = vpop.f32.mrf.mxu0
    %v1467 = vadd.f32 0.0, %v1466
    %v1468 = vpop.f32.mrf.mxu0
    %v1469 = vadd.f32 0.0, %v1468
    %1470 = vmatprep.mubr.f32.mxu0 0.0
    %1471 = vmatmul.mubr.f32.gmra.mxu0 %v1154
    %v1472 = vpop.f32.mrf.mxu0
    %v1473 = vadd.f32 0.0, %v1472
    %v1474 = vpop.f32.mrf.mxu0
    %v1475 = vadd.f32 0.0, %v1474
    %1476 = vmatprep.mubr.f32.mxu0 0.0
    %1477 = vmatmul.mubr.f32.gmra.mxu0 %v1157
    %v1478 = vpop.f32.mrf.mxu0
    %v1479 = vadd.f32 0.0, %v1478
    %v1480 = vpop.f32.mrf.mxu0
    %v1481 = vadd.f32 0.0, %v1480
    %1482 = vmatprep.mubr.f32.mxu0 0.0
    %1483 = vmatmul.mubr.f32.gmra.mxu0 %v1160
    %v1484 = vpop.f32.mrf.mxu0
    %v1485 = vadd.f32 0.0, %v1484
    %v1486 = vpop.f32.mrf.mxu0
    %v1487 = vadd.f32 0.0, %v1486
    %1488 = vmatprep.mubr.f32.mxu0 0.0
    %1489 = vmatmul.mubr.f32.gmra.mxu0 %v1163
    %v1490 = vpop.f32.mrf.mxu0
    %v1491 = vadd.f32 0.0, %v1490
    %v1492 = vpop.f32.mrf.mxu0
    %v1493 = vadd.f32 0.0, %v1492
    %1494 = vmatprep.mubr.f32.mxu0 0.0
    %1495 = vmatmul.mubr.f32.gmra.mxu0 %v1166
    %v1496 = vpop.f32.mrf.mxu0
    %v1497 = vadd.f32 0.0, %v1496
    %v1498 = vpop.f32.mrf.mxu0
    %v1499 = vadd.f32 0.0, %v1498
    %1500 = vmatprep.mubr.f32.mxu0 0.0
    %1501 = vmatmul.mubr.f32.gmra.mxu0 %v1169
    %v1502 = vpop.f32.mrf.mxu0
    %v1503 = vadd.f32 0.0, %v1502
    %v1504 = vpop.f32.mrf.mxu0
    %v1505 = vadd.f32 0.0, %v1504
    %1506 = vmatprep.mubr.f32.mxu0 0.0
    %1507 = vmatmul.mubr.f32.gmra.mxu0 %v1172
    %v1508 = vpop.f32.mrf.mxu0
    %v1509 = vadd.f32 0.0, %v1508
    %v1510 = vpop.f32.mrf.mxu0
    %v1511 = vadd.f32 0.0, %v1510
    %1512 = vdwg.mxu0
    %1513 = vmatprep.subr.mxu0 0.0
    %1514 = vmatpush1.msra.mxu0 0.0
    %1515 = vmatprep.subr.mxu0 0.0
    %1516 = vmatpush1.msra.mxu0 0.0
    %1517 = vmatprep.subr.mxu0 0.0
    %1518 = vmatpush1.msra.mxu0 0.0
    %1519 = vmatprep.subr.mxu0 0.0
    %1520 = vmatpush1.msra.mxu0 0.0
    %1521 = vmatprep.subr.mxu0 0.0
    %1522 = vmatpush1.msra.mxu0 0.0
    %1523 = vmatprep.subr.mxu0 0.0
    %1524 = vmatpush1.msra.mxu0 0.0
    %1525 = vmatprep.subr.mxu0 0.0
    %1526 = vmatpush1.msra.mxu0 0.0
    %1527 = vmatprep.subr.mxu0 0.0
    %1528 = vmatpush1.msra.mxu0 0.0
    %1529 = vmatprep.subr.mxu0 0.0
    %1530 = vmatpush1.msra.mxu0 0.0
    %1531 = vmatprep.subr.mxu0 0.0
    %1532 = vmatpush1.msra.mxu0 0.0
    %1533 = vmatprep.subr.mxu0 0.0
    %1534 = vmatpush1.msra.mxu0 0.0
    %1535 = vmatprep.subr.mxu0 0.0
    %1536 = vmatpush1.msra.mxu0 0.0
    %1537 = vmatprep.subr.mxu0 %v411
    %1538 = vmatpush1.msra.mxu0 %v410
    %1539 = vmatprep.subr.mxu0 %v403
    %1540 = vmatpush1.msra.mxu0 %v402
    %1541 = vmatprep.subr.mxu0 %v395
    %1542 = vmatpush1.msra.mxu0 %v394
    %1543 = vmatprep.subr.mxu0 %v387
    %1544 = vmatpush1.msra.mxu0 %v386
    %1545 = vmatprep.subr.mxu0 0.0
    %1546 = vmatpush2.msra.mxu0 0.0
    %1547 = vmatprep.subr.mxu0 0.0
    %1548 = vmatpush2.msra.mxu0 0.0
    %1549 = vmatprep.subr.mxu0 0.0
    %1550 = vmatpush2.msra.mxu0 0.0
    %1551 = vmatprep.subr.mxu0 0.0
    %1552 = vmatpush2.msra.mxu0 0.0
    %1553 = vmatprep.subr.mxu0 0.0
    %1554 = vmatpush2.msra.mxu0 0.0
    %1555 = vmatprep.subr.mxu0 0.0
    %1556 = vmatpush2.msra.mxu0 0.0
    %1557 = vmatprep.subr.mxu0 0.0
    %1558 = vmatpush2.msra.mxu0 0.0
    %1559 = vmatprep.subr.mxu0 0.0
    %1560 = vmatpush2.msra.mxu0 0.0
    %1561 = vmatprep.subr.mxu0 0.0
    %1562 = vmatpush2.msra.mxu0 0.0
    %1563 = vmatprep.subr.mxu0 0.0
    %1564 = vmatpush2.msra.mxu0 0.0
    %1565 = vmatprep.subr.mxu0 0.0
    %1566 = vmatpush2.msra.mxu0 0.0
    %1567 = vmatprep.subr.mxu0 0.0
    %1568 = vmatpush2.msra.mxu0 0.0
    %1569 = vmatprep.subr.mxu0 0.0
    %1570 = vmatpush2.msra.mxu0 0.0
    %1571 = vmatprep.subr.mxu0 0.0
    %1572 = vmatpush2.msra.mxu0 0.0
    %1573 = vmatprep.subr.mxu0 0.0
    %1574 = vmatpush2.msra.mxu0 0.0
    %1575 = vmatprep.subr.mxu0 0.0
    %1576 = vmatpush2.msra.mxu0 0.0
    %1577 = vmatprep.mubr.f32.mxu0 0.0
    %1578 = vmatmul.mubr.f32.gmra.mxu0 %v1151
    %v1579 = vpop.f32.mrf.mxu0
    %v1580 = vadd.f32 0.0, %v1579
    %v1581 = vpop.f32.mrf.mxu0
    %v1582 = vadd.f32 0.0, %v1581
    %1583 = vmatprep.mubr.f32.mxu0 0.0
    %1584 = vmatmul.mubr.f32.gmra.mxu0 %v1154
    %v1585 = vpop.f32.mrf.mxu0
    %v1586 = vadd.f32 0.0, %v1585
    %v1587 = vpop.f32.mrf.mxu0
    %v1588 = vadd.f32 0.0, %v1587
    %1589 = vmatprep.mubr.f32.mxu0 0.0
    %1590 = vmatmul.mubr.f32.gmra.mxu0 %v1157
    %v1591 = vpop.f32.mrf.mxu0
    %v1592 = vadd.f32 0.0, %v1591
    %v1593 = vpop.f32.mrf.mxu0
    %v1594 = vadd.f32 0.0, %v1593
    %1595 = vmatprep.mubr.f32.mxu0 0.0
    %1596 = vmatmul.mubr.f32.gmra.mxu0 %v1160
    %v1597 = vpop.f32.mrf.mxu0
    %v1598 = vadd.f32 0.0, %v1597
    %v1599 = vpop.f32.mrf.mxu0
    %v1600 = vadd.f32 0.0, %v1599
    %1601 = vmatprep.mubr.f32.mxu0 0.0
    %1602 = vmatmul.mubr.f32.gmra.mxu0 %v1163
    %v1603 = vpop.f32.mrf.mxu0
    %v1604 = vadd.f32 0.0, %v1603
    %v1605 = vpop.f32.mrf.mxu0
    %v1606 = vadd.f32 0.0, %v1605
    %1607 = vmatprep.mubr.f32.mxu0 0.0
    %1608 = vmatmul.mubr.f32.gmra.mxu0 %v1166
    %v1609 = vpop.f32.mrf.mxu0
    %v1610 = vadd.f32 0.0, %v1609
    %v1611 = vpop.f32.mrf.mxu0
    %v1612 = vadd.f32 0.0, %v1611
    %1613 = vmatprep.mubr.f32.mxu0 0.0
    %1614 = vmatmul.mubr.f32.gmra.mxu0 %v1169
    %v1615 = vpop.f32.mrf.mxu0
    %v1616 = vadd.f32 0.0, %v1615
    %v1617 = vpop.f32.mrf.mxu0
    %v1618 = vadd.f32 0.0, %v1617
    %1619 = vmatprep.mubr.f32.mxu0 0.0
    %1620 = vmatmul.mubr.f32.gmra.mxu0 %v1172
    %v1621 = vpop.f32.mrf.mxu0
    %v1622 = vadd.f32 0.0, %v1621
    %v1623 = vpop.f32.mrf.mxu0
    %v1624 = vadd.f32 0.0, %v1623
    %1625 = vdwg.mxu0
    %v1626 = vmul.f32 %v765, %v1241
    %v1627 = vmul.f32 %v767, %v1243
    %v1628 = vmul.f32 %v878, %v1354
    %v1629 = vmul.f32 %v880, %v1356
    %v1630 = vmul.f32 %v991, %v1467
    %v1631 = vmul.f32 %v993, %v1469
    %v1632 = vmul.f32 %v1104, %v1580
    %v1633 = vmul.f32 %v1106, %v1582
    %v1634 = vmul.f32 %v771, %v1247
    %v1635 = vmul.f32 %v773, %v1249
    %v1636 = vmul.f32 %v884, %v1360
    %v1637 = vmul.f32 %v886, %v1362
    %v1638 = vmul.f32 %v997, %v1473
    %v1639 = vmul.f32 %v999, %v1475
    %v1640 = vmul.f32 %v1110, %v1586
    %v1641 = vmul.f32 %v1112, %v1588
    %v1642 = vmul.f32 %v777, %v1253
    %v1643 = vmul.f32 %v779, %v1255
    %v1644 = vmul.f32 %v890, %v1366
    %v1645 = vmul.f32 %v892, %v1368
    %v1646 = vmul.f32 %v1003, %v1479
    %v1647 = vmul.f32 %v1005, %v1481
    %v1648 = vmul.f32 %v1116, %v1592
    %v1649 = vmul.f32 %v1118, %v1594
    %v1650 = vmul.f32 %v783, %v1259
    %v1651 = vmul.f32 %v785, %v1261
    %v1652 = vmul.f32 %v896, %v1372
    %v1653 = vmul.f32 %v898, %v1374
    %v1654 = vmul.f32 %v1009, %v1485
    %v1655 = vmul.f32 %v1011, %v1487
    %v1656 = vmul.f32 %v1122, %v1598
    %v1657 = vmul.f32 %v1124, %v1600
    %v1658 = vmul.f32 %v789, %v1265
    %v1659 = vmul.f32 %v791, %v1267
    %v1660 = vmul.f32 %v902, %v1378
    %v1661 = vmul.f32 %v904, %v1380
    %v1662 = vmul.f32 %v1015, %v1491
    %v1663 = vmul.f32 %v1017, %v1493
    %v1664 = vmul.f32 %v1128, %v1604
    %v1665 = vmul.f32 %v1130, %v1606
    %v1666 = vmul.f32 %v795, %v1271
    %v1667 = vmul.f32 %v797, %v1273
    %v1668 = vmul.f32 %v908, %v1384
    %v1669 = vmul.f32 %v910, %v1386
    %v1670 = vmul.f32 %v1021, %v1497
    %v1671 = vmul.f32 %v1023, %v1499
    %v1672 = vmul.f32 %v1134, %v1610
    %v1673 = vmul.f32 %v1136, %v1612
    %v1674 = vmul.f32 %v801, %v1277
    %v1675 = vmul.f32 %v803, %v1279
    %v1676 = vmul.f32 %v914, %v1390
    %v1677 = vmul.f32 %v916, %v1392
    %v1678 = vmul.f32 %v1027, %v1503
    %v1679 = vmul.f32 %v1029, %v1505
    %v1680 = vmul.f32 %v1140, %v1616
    %v1681 = vmul.f32 %v1142, %v1618
    %v1682 = vmul.f32 %v807, %v1283
    %v1683 = vmul.f32 %v809, %v1285
    %v1684 = vmul.f32 %v920, %v1396
    %v1685 = vmul.f32 %v922, %v1398
    %v1686 = vmul.f32 %v1033, %v1509
    %v1687 = vmul.f32 %v1035, %v1511
    %v1688 = vmul.f32 %v1146, %v1622
    %v1689 = vmul.f32 %v1148, %v1624
    %v1690 = vld [vmem:[#allocation7] sm:$0xff]
    %v1691 = vld [vmem:[#allocation7 + $0x8] sm:$0xff]
    %v1692 = vld [vmem:[#allocation7 + $0x10] sm:$0xff]
    %v1693 = vld [vmem:[#allocation7 + $0x18] sm:$0xff]
    %v1694 = vld [vmem:[#allocation7 + $0x20] sm:$0xff]
    %v1695 = vld [vmem:[#allocation7 + $0x28] sm:$0xff]
    %v1696 = vld [vmem:[#allocation7 + $0x30] sm:$0xff]
    %v1697 = vld [vmem:[#allocation7 + $0x38] sm:$0xff]
    %v1698 = vld [vmem:[#allocation7 + $0x40] sm:$0xff]
    %v1699 = vld [vmem:[#allocation7 + $0x48] sm:$0xff]
    %v1700 = vld [vmem:[#allocation7 + $0x50] sm:$0xff]
    %v1701 = vld [vmem:[#allocation7 + $0x58] sm:$0xff]
    %v1702 = vld [vmem:[#allocation7 + $0x60] sm:$0xff]
    %v1703 = vld [vmem:[#allocation7 + $0x68] sm:$0xff]
    %v1704 = vld [vmem:[#allocation7 + $0x70] sm:$0xff]
    %v1705 = vld [vmem:[#allocation7 + $0x78] sm:$0xff]
    %v1706 = vld [vmem:[#allocation7 + $0x80] sm:$0xff]
    %v1707 = vld [vmem:[#allocation7 + $0x88] sm:$0xff]
    %v1708 = vld [vmem:[#allocation7 + $0x90] sm:$0xff]
    %v1709 = vld [vmem:[#allocation7 + $0x98] sm:$0xff]
    %v1710 = vld [vmem:[#allocation7 + $0xa0] sm:$0xff]
    %v1711 = vld [vmem:[#allocation7 + $0xa8] sm:$0xff]
    %v1712 = vld [vmem:[#allocation7 + $0xb0] sm:$0xff]
    %v1713 = vld [vmem:[#allocation7 + $0xb8] sm:$0xff]
    %v1714 = vld [vmem:[#allocation7 + $0xc0] sm:$0xff]
    %v1715 = vld [vmem:[#allocation7 + $0xc8] sm:$0xff]
    %v1716 = vld [vmem:[#allocation7 + $0xd0] sm:$0xff]
    %v1717 = vld [vmem:[#allocation7 + $0xd8] sm:$0xff]
    %v1718 = vld [vmem:[#allocation7 + $0xe0] sm:$0xff]
    %v1719 = vld [vmem:[#allocation7 + $0xe8] sm:$0xff]
    %v1720 = vld [vmem:[#allocation7 + $0xf0] sm:$0xff]
    %v1721 = vld [vmem:[#allocation7 + $0xf8] sm:$0xff]
    %v1722 = vld [vmem:[#allocation7 + $0x100] sm:$0xff]
    %v1723 = vld [vmem:[#allocation7 + $0x108] sm:$0xff]
    %v1724 = vld [vmem:[#allocation7 + $0x110] sm:$0xff]
    %v1725 = vld [vmem:[#allocation7 + $0x118] sm:$0xff]
    %v1726 = vld [vmem:[#allocation7 + $0x120] sm:$0xff]
    %v1727 = vld [vmem:[#allocation7 + $0x128] sm:$0xff]
    %v1728 = vld [vmem:[#allocation7 + $0x130] sm:$0xff]
    %v1729 = vld [vmem:[#allocation7 + $0x138] sm:$0xff]
    %v1730 = vld [vmem:[#allocation7 + $0x140] sm:$0xff]
    %v1731 = vld [vmem:[#allocation7 + $0x148] sm:$0xff]
    %v1732 = vld [vmem:[#allocation7 + $0x150] sm:$0xff]
    %v1733 = vld [vmem:[#allocation7 + $0x158] sm:$0xff]
    %v1734 = vld [vmem:[#allocation7 + $0x160] sm:$0xff]
    %v1735 = vld [vmem:[#allocation7 + $0x168] sm:$0xff]
    %v1736 = vld [vmem:[#allocation7 + $0x170] sm:$0xff]
    %v1737 = vld [vmem:[#allocation7 + $0x178] sm:$0xff]
    %v1738 = vld [vmem:[#allocation7 + $0x180] sm:$0xff]
    %v1739 = vld [vmem:[#allocation7 + $0x188] sm:$0xff]
    %v1740 = vld [vmem:[#allocation7 + $0x190] sm:$0xff]
    %v1741 = vld [vmem:[#allocation7 + $0x198] sm:$0xff]
    %v1742 = vld [vmem:[#allocation7 + $0x1a0] sm:$0xff]
    %v1743 = vld [vmem:[#allocation7 + $0x1a8] sm:$0xff]
    %v1744 = vld [vmem:[#allocation7 + $0x1b0] sm:$0xff]
    %v1745 = vld [vmem:[#allocation7 + $0x1b8] sm:$0xff]
    %v1746 = vld [vmem:[#allocation7 + $0x1c0] sm:$0xff]
    %v1747 = vld [vmem:[#allocation7 + $0x1c8] sm:$0xff]
    %v1748 = vld [vmem:[#allocation7 + $0x1d0] sm:$0xff]
    %v1749 = vld [vmem:[#allocation7 + $0x1d8] sm:$0xff]
    %v1750 = vld [vmem:[#allocation7 + $0x1e0] sm:$0xff]
    %v1751 = vld [vmem:[#allocation7 + $0x1e8] sm:$0xff]
    %v1752 = vld [vmem:[#allocation7 + $0x1f0] sm:$0xff]
    %v1753 = vld [vmem:[#allocation7 + $0x1f8] sm:$0xff]
    %v1754 = vld [vmem:[#allocation7 + $0x200] sm:$0xff]
    %v1755 = vld [vmem:[#allocation7 + $0x208] sm:$0xff]
    %v1756 = vld [vmem:[#allocation7 + $0x210] sm:$0xff]
    %v1757 = vld [vmem:[#allocation7 + $0x218] sm:$0xff]
    %v1758 = vld [vmem:[#allocation7 + $0x220] sm:$0xff]
    %v1759 = vld [vmem:[#allocation7 + $0x228] sm:$0xff]
    %v1760 = vld [vmem:[#allocation7 + $0x230] sm:$0xff]
    %v1761 = vld [vmem:[#allocation7 + $0x238] sm:$0xff]
    %v1762 = vld [vmem:[#allocation7 + $0x240] sm:$0xff]
    %v1763 = vld [vmem:[#allocation7 + $0x248] sm:$0xff]
    %v1764 = vld [vmem:[#allocation7 + $0x250] sm:$0xff]
    %v1765 = vld [vmem:[#allocation7 + $0x258] sm:$0xff]
    %v1766 = vld [vmem:[#allocation7 + $0x260] sm:$0xff]
    %v1767 = vld [vmem:[#allocation7 + $0x268] sm:$0xff]
    %v1768 = vld [vmem:[#allocation7 + $0x270] sm:$0xff]
    %v1769 = vld [vmem:[#allocation7 + $0x278] sm:$0xff]
    %v1770 = vld [vmem:[#allocation7 + $0x280] sm:$0xff]
    %v1771 = vld [vmem:[#allocation7 + $0x288] sm:$0xff]
    %v1772 = vld [vmem:[#allocation7 + $0x290] sm:$0xff]
    %v1773 = vld [vmem:[#allocation7 + $0x298] sm:$0xff]
    %v1774 = vld [vmem:[#allocation7 + $0x2a0] sm:$0xff]
    %v1775 = vld [vmem:[#allocation7 + $0x2a8] sm:$0xff]
    %v1776 = vld [vmem:[#allocation7 + $0x2b0] sm:$0xff]
    %v1777 = vld [vmem:[#allocation7 + $0x2b8] sm:$0xff]
    %v1778 = vld [vmem:[#allocation7 + $0x2c0] sm:$0xff]
    %v1779 = vld [vmem:[#allocation7 + $0x2c8] sm:$0xff]
    %v1780 = vld [vmem:[#allocation7 + $0x2d0] sm:$0xff]
    %v1781 = vld [vmem:[#allocation7 + $0x2d8] sm:$0xff]
    %v1782 = vld [vmem:[#allocation7 + $0x2e0] sm:$0xff]
    %v1783 = vld [vmem:[#allocation7 + $0x2e8] sm:$0xff]
    %v1784 = vld [vmem:[#allocation7 + $0x2f0] sm:$0xff]
    %v1785 = vld [vmem:[#allocation7 + $0x2f8] sm:$0xff]
    %v1786 = vld [vmem:[#allocation7 + $0x300] sm:$0xff]
    %v1787 = vld [vmem:[#allocation7 + $0x308] sm:$0xff]
    %v1788 = vld [vmem:[#allocation7 + $0x310] sm:$0xff]
    %v1789 = vld [vmem:[#allocation7 + $0x318] sm:$0xff]
    %v1790 = vld [vmem:[#allocation7 + $0x320] sm:$0xff]
    %v1791 = vld [vmem:[#allocation7 + $0x328] sm:$0xff]
    %v1792 = vld [vmem:[#allocation7 + $0x330] sm:$0xff]
    %v1793 = vld [vmem:[#allocation7 + $0x338] sm:$0xff]
    %v1794 = vld [vmem:[#allocation7 + $0x340] sm:$0xff]
    %v1795 = vld [vmem:[#allocation7 + $0x348] sm:$0xff]
    %v1796 = vld [vmem:[#allocation7 + $0x350] sm:$0xff]
    %v1797 = vld [vmem:[#allocation7 + $0x358] sm:$0xff]
    %v1798 = vld [vmem:[#allocation7 + $0x360] sm:$0xff]
    %v1799 = vld [vmem:[#allocation7 + $0x368] sm:$0xff]
    %v1800 = vld [vmem:[#allocation7 + $0x370] sm:$0xff]
    %v1801 = vld [vmem:[#allocation7 + $0x378] sm:$0xff]
    %v1802 = vld [vmem:[#allocation7 + $0x380] sm:$0xff]
    %v1803 = vld [vmem:[#allocation7 + $0x388] sm:$0xff]
    %v1804 = vld [vmem:[#allocation7 + $0x390] sm:$0xff]
    %v1805 = vld [vmem:[#allocation7 + $0x398] sm:$0xff]
    %v1806 = vld [vmem:[#allocation7 + $0x3a0] sm:$0xff]
    %v1807 = vld [vmem:[#allocation7 + $0x3a8] sm:$0xff]
    %v1808 = vld [vmem:[#allocation7 + $0x3b0] sm:$0xff]
    %v1809 = vld [vmem:[#allocation7 + $0x3b8] sm:$0xff]
    %v1810 = vld [vmem:[#allocation7 + $0x3c0] sm:$0xff]
    %v1811 = vld [vmem:[#allocation7 + $0x3c8] sm:$0xff]
    %v1812 = vld [vmem:[#allocation7 + $0x3d0] sm:$0xff]
    %v1813 = vld [vmem:[#allocation7 + $0x3d8] sm:$0xff]
    %v1814 = vld [vmem:[#allocation7 + $0x3e0] sm:$0xff]
    %v1815 = vld [vmem:[#allocation7 + $0x3e8] sm:$0xff]
    %v1816 = vld [vmem:[#allocation7 + $0x3f0] sm:$0xff]
    %v1817 = vld [vmem:[#allocation7 + $0x3f8] sm:$0xff]
    %1818 = vmatprep.subr.mxu0 0.0
    %1819 = vmatpush1.msra.mxu0 %v1705
    %1820 = vmatprep.subr.mxu0 0.0
    %1821 = vmatpush1.msra.mxu0 %v1704
    %1822 = vmatprep.subr.mxu0 0.0
    %1823 = vmatpush1.msra.mxu0 %v1703
    %1824 = vmatprep.subr.mxu0 0.0
    %1825 = vmatpush1.msra.mxu0 %v1702
    %1826 = vmatprep.subr.mxu0 0.0
    %1827 = vmatpush1.msra.mxu0 %v1701
    %1828 = vmatprep.subr.mxu0 0.0
    %1829 = vmatpush1.msra.mxu0 %v1700
    %1830 = vmatprep.subr.mxu0 0.0
    %1831 = vmatpush1.msra.mxu0 %v1699
    %1832 = vmatprep.subr.mxu0 0.0
    %1833 = vmatpush1.msra.mxu0 %v1698
    %1834 = vmatprep.subr.mxu0 0.0
    %1835 = vmatpush1.msra.mxu0 %v1697
    %1836 = vmatprep.subr.mxu0 0.0
    %1837 = vmatpush1.msra.mxu0 %v1696
    %1838 = vmatprep.subr.mxu0 0.0
    %1839 = vmatpush1.msra.mxu0 %v1695
    %1840 = vmatprep.subr.mxu0 0.0
    %1841 = vmatpush1.msra.mxu0 %v1694
    %1842 = vmatprep.subr.mxu0 0.0
    %1843 = vmatpush1.msra.mxu0 %v1693
    %1844 = vmatprep.subr.mxu0 0.0
    %1845 = vmatpush1.msra.mxu0 %v1692
    %1846 = vmatprep.subr.mxu0 0.0
    %1847 = vmatpush1.msra.mxu0 %v1691
    %1848 = vmatprep.subr.mxu0 0.0
    %1849 = vmatpush1.msra.mxu0 %v1690
    %1850 = vmatprep.subr.mxu0 0.0
    %1851 = vmatpush2.msra.mxu0 %v1721
    %1852 = vmatprep.subr.mxu0 0.0
    %1853 = vmatpush2.msra.mxu0 %v1720
    %1854 = vmatprep.subr.mxu0 0.0
    %1855 = vmatpush2.msra.mxu0 %v1719
    %1856 = vmatprep.subr.mxu0 0.0
    %1857 = vmatpush2.msra.mxu0 %v1718
    %1858 = vmatprep.subr.mxu0 0.0
    %1859 = vmatpush2.msra.mxu0 %v1717
    %1860 = vmatprep.subr.mxu0 0.0
    %1861 = vmatpush2.msra.mxu0 %v1716
    %1862 = vmatprep.subr.mxu0 0.0
    %1863 = vmatpush2.msra.mxu0 %v1715
    %1864 = vmatprep.subr.mxu0 0.0
    %1865 = vmatpush2.msra.mxu0 %v1714
    %1866 = vmatprep.subr.mxu0 0.0
    %1867 = vmatpush2.msra.mxu0 %v1713
    %1868 = vmatprep.subr.mxu0 0.0
    %1869 = vmatpush2.msra.mxu0 %v1712
    %1870 = vmatprep.subr.mxu0 0.0
    %1871 = vmatpush2.msra.mxu0 %v1711
    %1872 = vmatprep.subr.mxu0 0.0
    %1873 = vmatpush2.msra.mxu0 %v1710
    %1874 = vmatprep.subr.mxu0 0.0
    %1875 = vmatpush2.msra.mxu0 %v1709
    %1876 = vmatprep.subr.mxu0 0.0
    %1877 = vmatpush2.msra.mxu0 %v1708
    %1878 = vmatprep.subr.mxu0 0.0
    %1879 = vmatpush2.msra.mxu0 %v1707
    %1880 = vmatprep.subr.mxu0 0.0
    %1881 = vmatpush2.msra.mxu0 %v1706
    %1882 = vmatprep.mubr.f32.mxu0 %v1627
    %1883 = vmatmul.mubr.f32.gmra.mxu0 %v1626
    %v1884 = vpop.f32.mrf.mxu0
    %v1885 = vadd.f32 0.0, %v1884
    %v1886 = vpop.f32.mrf.mxu0
    %1887 = vmatprep.mubr.f32.mxu0 %v1635
    %1888 = vmatmul.mubr.f32.gmra.mxu0 %v1634
    %v1889 = vpop.f32.mrf.mxu0
    %v1890 = vadd.f32 0.0, %v1889
    %v1891 = vpop.f32.mrf.mxu0
    %1892 = vmatprep.mubr.f32.mxu0 %v1643
    %1893 = vmatmul.mubr.f32.gmra.mxu0 %v1642
    %v1894 = vpop.f32.mrf.mxu0
    %v1895 = vadd.f32 0.0, %v1894
    %v1896 = vpop.f32.mrf.mxu0
    %1897 = vmatprep.mubr.f32.mxu0 %v1651
    %1898 = vmatmul.mubr.f32.gmra.mxu0 %v1650
    %v1899 = vpop.f32.mrf.mxu0
    %v1900 = vadd.f32 0.0, %v1899
    %v1901 = vpop.f32.mrf.mxu0
    %1902 = vmatprep.mubr.f32.mxu0 %v1659
    %1903 = vmatmul.mubr.f32.gmra.mxu0 %v1658
    %v1904 = vpop.f32.mrf.mxu0
    %v1905 = vadd.f32 0.0, %v1904
    %v1906 = vpop.f32.mrf.mxu0
    %1907 = vmatprep.mubr.f32.mxu0 %v1667
    %1908 = vmatmul.mubr.f32.gmra.mxu0 %v1666
    %v1909 = vpop.f32.mrf.mxu0
    %v1910 = vadd.f32 0.0, %v1909
    %v1911 = vpop.f32.mrf.mxu0
    %1912 = vmatprep.mubr.f32.mxu0 %v1675
    %1913 = vmatmul.mubr.f32.gmra.mxu0 %v1674
    %v1914 = vpop.f32.mrf.mxu0
    %v1915 = vadd.f32 0.0, %v1914
    %v1916 = vpop.f32.mrf.mxu0
    %1917 = vmatprep.mubr.f32.mxu0 %v1683
    %1918 = vmatmul.mubr.f32.gmra.mxu0 %v1682
    %v1919 = vpop.f32.mrf.mxu0
    %v1920 = vadd.f32 0.0, %v1919
    %v1921 = vpop.f32.mrf.mxu0
    %1922 = vdwg.mxu0
    %1923 = vmatprep.subr.mxu0 0.0
    %1924 = vmatpush1.msra.mxu0 %v1737
    %1925 = vmatprep.subr.mxu0 0.0
    %1926 = vmatpush1.msra.mxu0 %v1736
    %1927 = vmatprep.subr.mxu0 0.0
    %1928 = vmatpush1.msra.mxu0 %v1735
    %1929 = vmatprep.subr.mxu0 0.0
    %1930 = vmatpush1.msra.mxu0 %v1734
    %1931 = vmatprep.subr.mxu0 0.0
    %1932 = vmatpush1.msra.mxu0 %v1733
    %1933 = vmatprep.subr.mxu0 0.0
    %1934 = vmatpush1.msra.mxu0 %v1732
    %1935 = vmatprep.subr.mxu0 0.0
    %1936 = vmatpush1.msra.mxu0 %v1731
    %1937 = vmatprep.subr.mxu0 0.0
    %1938 = vmatpush1.msra.mxu0 %v1730
    %1939 = vmatprep.subr.mxu0 0.0
    %1940 = vmatpush1.msra.mxu0 %v1729
    %1941 = vmatprep.subr.mxu0 0.0
    %1942 = vmatpush1.msra.mxu0 %v1728
    %1943 = vmatprep.subr.mxu0 0.0
    %1944 = vmatpush1.msra.mxu0 %v1727
    %1945 = vmatprep.subr.mxu0 0.0
    %1946 = vmatpush1.msra.mxu0 %v1726
    %1947 = vmatprep.subr.mxu0 0.0
    %1948 = vmatpush1.msra.mxu0 %v1725
    %1949 = vmatprep.subr.mxu0 0.0
    %1950 = vmatpush1.msra.mxu0 %v1724
    %1951 = vmatprep.subr.mxu0 0.0
    %1952 = vmatpush1.msra.mxu0 %v1723
    %1953 = vmatprep.subr.mxu0 0.0
    %1954 = vmatpush1.msra.mxu0 %v1722
    %1955 = vmatprep.subr.mxu0 0.0
    %1956 = vmatpush2.msra.mxu0 %v1753
    %1957 = vmatprep.subr.mxu0 0.0
    %1958 = vmatpush2.msra.mxu0 %v1752
    %1959 = vmatprep.subr.mxu0 0.0
    %1960 = vmatpush2.msra.mxu0 %v1751
    %1961 = vmatprep.subr.mxu0 0.0
    %1962 = vmatpush2.msra.mxu0 %v1750
    %1963 = vmatprep.subr.mxu0 0.0
    %1964 = vmatpush2.msra.mxu0 %v1749
    %1965 = vmatprep.subr.mxu0 0.0
    %1966 = vmatpush2.msra.mxu0 %v1748
    %1967 = vmatprep.subr.mxu0 0.0
    %1968 = vmatpush2.msra.mxu0 %v1747
    %1969 = vmatprep.subr.mxu0 0.0
    %1970 = vmatpush2.msra.mxu0 %v1746
    %1971 = vmatprep.subr.mxu0 0.0
    %1972 = vmatpush2.msra.mxu0 %v1745
    %1973 = vmatprep.subr.mxu0 0.0
    %1974 = vmatpush2.msra.mxu0 %v1744
    %1975 = vmatprep.subr.mxu0 0.0
    %1976 = vmatpush2.msra.mxu0 %v1743
    %1977 = vmatprep.subr.mxu0 0.0
    %1978 = vmatpush2.msra.mxu0 %v1742
    %1979 = vmatprep.subr.mxu0 0.0
    %1980 = vmatpush2.msra.mxu0 %v1741
    %1981 = vmatprep.subr.mxu0 0.0
    %1982 = vmatpush2.msra.mxu0 %v1740
    %1983 = vmatprep.subr.mxu0 0.0
    %1984 = vmatpush2.msra.mxu0 %v1739
    %1985 = vmatprep.subr.mxu0 0.0
    %1986 = vmatpush2.msra.mxu0 %v1738
    %1987 = vmatprep.mubr.f32.mxu0 %v1629
    %1988 = vmatmul.mubr.f32.gmra.mxu0 %v1628
    %v1989 = vpop.f32.mrf.mxu0
    %v1990 = vadd.f32 %v1885, %v1989
    %v1991 = vpop.f32.mrf.mxu0
    %1992 = vmatprep.mubr.f32.mxu0 %v1637
    %1993 = vmatmul.mubr.f32.gmra.mxu0 %v1636
    %v1994 = vpop.f32.mrf.mxu0
    %v1995 = vadd.f32 %v1890, %v1994
    %v1996 = vpop.f32.mrf.mxu0
    %1997 = vmatprep.mubr.f32.mxu0 %v1645
    %1998 = vmatmul.mubr.f32.gmra.mxu0 %v1644
    %v1999 = vpop.f32.mrf.mxu0
    %v2000 = vadd.f32 %v1895, %v1999
    %v2001 = vpop.f32.mrf.mxu0
    %2002 = vmatprep.mubr.f32.mxu0 %v1653
    %2003 = vmatmul.mubr.f32.gmra.mxu0 %v1652
    %v2004 = vpop.f32.mrf.mxu0
    %v2005 = vadd.f32 %v1900, %v2004
    %v2006 = vpop.f32.mrf.mxu0
    %2007 = vmatprep.mubr.f32.mxu0 %v1661
    %2008 = vmatmul.mubr.f32.gmra.mxu0 %v1660
    %v2009 = vpop.f32.mrf.mxu0
    %v2010 = vadd.f32 %v1905, %v2009
    %v2011 = vpop.f32.mrf.mxu0
    %2012 = vmatprep.mubr.f32.mxu0 %v1669
    %2013 = vmatmul.mubr.f32.gmra.mxu0 %v1668
    %v2014 = vpop.f32.mrf.mxu0
    %v2015 = vadd.f32 %v1910, %v2014
    %v2016 = vpop.f32.mrf.mxu0
    %2017 = vmatprep.mubr.f32.mxu0 %v1677
    %2018 = vmatmul.mubr.f32.gmra.mxu0 %v1676
    %v2019 = vpop.f32.mrf.mxu0
    %v2020 = vadd.f32 %v1915, %v2019
    %v2021 = vpop.f32.mrf.mxu0
    %2022 = vmatprep.mubr.f32.mxu0 %v1685
    %2023 = vmatmul.mubr.f32.gmra.mxu0 %v1684
    %v2024 = vpop.f32.mrf.mxu0
    %v2025 = vadd.f32 %v1920, %v2024
    %v2026 = vpop.f32.mrf.mxu0
    %2027 = vdwg.mxu0
    %2028 = vmatprep.subr.mxu0 0.0
    %2029 = vmatpush1.msra.mxu0 %v1769
    %2030 = vmatprep.subr.mxu0 0.0
    %2031 = vmatpush1.msra.mxu0 %v1768
    %2032 = vmatprep.subr.mxu0 0.0
    %2033 = vmatpush1.msra.mxu0 %v1767
    %2034 = vmatprep.subr.mxu0 0.0
    %2035 = vmatpush1.msra.mxu0 %v1766
    %2036 = vmatprep.subr.mxu0 0.0
    %2037 = vmatpush1.msra.mxu0 %v1765
    %2038 = vmatprep.subr.mxu0 0.0
    %2039 = vmatpush1.msra.mxu0 %v1764
    %2040 = vmatprep.subr.mxu0 0.0
    %2041 = vmatpush1.msra.mxu0 %v1763
    %2042 = vmatprep.subr.mxu0 0.0
    %2043 = vmatpush1.msra.mxu0 %v1762
    %2044 = vmatprep.subr.mxu0 0.0
    %2045 = vmatpush1.msra.mxu0 %v1761
    %2046 = vmatprep.subr.mxu0 0.0
    %2047 = vmatpush1.msra.mxu0 %v1760
    %2048 = vmatprep.subr.mxu0 0.0
    %2049 = vmatpush1.msra.mxu0 %v1759
    %2050 = vmatprep.subr.mxu0 0.0
    %2051 = vmatpush1.msra.mxu0 %v1758
    %2052 = vmatprep.subr.mxu0 0.0
    %2053 = vmatpush1.msra.mxu0 %v1757
    %2054 = vmatprep.subr.mxu0 0.0
    %2055 = vmatpush1.msra.mxu0 %v1756
    %2056 = vmatprep.subr.mxu0 0.0
    %2057 = vmatpush1.msra.mxu0 %v1755
    %2058 = vmatprep.subr.mxu0 0.0
    %2059 = vmatpush1.msra.mxu0 %v1754
    %2060 = vmatprep.subr.mxu0 0.0
    %2061 = vmatpush2.msra.mxu0 %v1785
    %2062 = vmatprep.subr.mxu0 0.0
    %2063 = vmatpush2.msra.mxu0 %v1784
    %2064 = vmatprep.subr.mxu0 0.0
    %2065 = vmatpush2.msra.mxu0 %v1783
    %2066 = vmatprep.subr.mxu0 0.0
    %2067 = vmatpush2.msra.mxu0 %v1782
    %2068 = vmatprep.subr.mxu0 0.0
    %2069 = vmatpush2.msra.mxu0 %v1781
    %2070 = vmatprep.subr.mxu0 0.0
    %2071 = vmatpush2.msra.mxu0 %v1780
    %2072 = vmatprep.subr.mxu0 0.0
    %2073 = vmatpush2.msra.mxu0 %v1779
    %2074 = vmatprep.subr.mxu0 0.0
    %2075 = vmatpush2.msra.mxu0 %v1778
    %2076 = vmatprep.subr.mxu0 0.0
    %2077 = vmatpush2.msra.mxu0 %v1777
    %2078 = vmatprep.subr.mxu0 0.0
    %2079 = vmatpush2.msra.mxu0 %v1776
    %2080 = vmatprep.subr.mxu0 0.0
    %2081 = vmatpush2.msra.mxu0 %v1775
    %2082 = vmatprep.subr.mxu0 0.0
    %2083 = vmatpush2.msra.mxu0 %v1774
    %2084 = vmatprep.subr.mxu0 0.0
    %2085 = vmatpush2.msra.mxu0 %v1773
    %2086 = vmatprep.subr.mxu0 0.0
    %2087 = vmatpush2.msra.mxu0 %v1772
    %2088 = vmatprep.subr.mxu0 0.0
    %2089 = vmatpush2.msra.mxu0 %v1771
    %2090 = vmatprep.subr.mxu0 0.0
    %2091 = vmatpush2.msra.mxu0 %v1770
    %2092 = vmatprep.mubr.f32.mxu0 %v1631
    %2093 = vmatmul.mubr.f32.gmra.mxu0 %v1630
    %v2094 = vpop.f32.mrf.mxu0
    %v2095 = vadd.f32 %v1990, %v2094
    %v2096 = vpop.f32.mrf.mxu0
    %2097 = vmatprep.mubr.f32.mxu0 %v1639
    %2098 = vmatmul.mubr.f32.gmra.mxu0 %v1638
    %v2099 = vpop.f32.mrf.mxu0
    %v2100 = vadd.f32 %v1995, %v2099
    %v2101 = vpop.f32.mrf.mxu0
    %2102 = vmatprep.mubr.f32.mxu0 %v1647
    %2103 = vmatmul.mubr.f32.gmra.mxu0 %v1646
    %v2104 = vpop.f32.mrf.mxu0
    %v2105 = vadd.f32 %v2000, %v2104
    %v2106 = vpop.f32.mrf.mxu0
    %2107 = vmatprep.mubr.f32.mxu0 %v1655
    %2108 = vmatmul.mubr.f32.gmra.mxu0 %v1654
    %v2109 = vpop.f32.mrf.mxu0
    %v2110 = vadd.f32 %v2005, %v2109
    %v2111 = vpop.f32.mrf.mxu0
    %2112 = vmatprep.mubr.f32.mxu0 %v1663
    %2113 = vmatmul.mubr.f32.gmra.mxu0 %v1662
    %v2114 = vpop.f32.mrf.mxu0
    %v2115 = vadd.f32 %v2010, %v2114
    %v2116 = vpop.f32.mrf.mxu0
    %2117 = vmatprep.mubr.f32.mxu0 %v1671
    %2118 = vmatmul.mubr.f32.gmra.mxu0 %v1670
    %v2119 = vpop.f32.mrf.mxu0
    %v2120 = vadd.f32 %v2015, %v2119
    %v2121 = vpop.f32.mrf.mxu0
    %2122 = vmatprep.mubr.f32.mxu0 %v1679
    %2123 = vmatmul.mubr.f32.gmra.mxu0 %v1678
    %v2124 = vpop.f32.mrf.mxu0
    %v2125 = vadd.f32 %v2020, %v2124
    %v2126 = vpop.f32.mrf.mxu0
    %2127 = vmatprep.mubr.f32.mxu0 %v1687
    %2128 = vmatmul.mubr.f32.gmra.mxu0 %v1686
    %v2129 = vpop.f32.mrf.mxu0
    %v2130 = vadd.f32 %v2025, %v2129
    %v2131 = vpop.f32.mrf.mxu0
    %2132 = vdwg.mxu0
    %2133 = vmatprep.subr.mxu0 0.0
    %2134 = vmatpush1.msra.mxu0 %v1801
    %2135 = vmatprep.subr.mxu0 0.0
    %2136 = vmatpush1.msra.mxu0 %v1800
    %2137 = vmatprep.subr.mxu0 0.0
    %2138 = vmatpush1.msra.mxu0 %v1799
    %2139 = vmatprep.subr.mxu0 0.0
    %2140 = vmatpush1.msra.mxu0 %v1798
    %2141 = vmatprep.subr.mxu0 0.0
    %2142 = vmatpush1.msra.mxu0 %v1797
    %2143 = vmatprep.subr.mxu0 0.0
    %2144 = vmatpush1.msra.mxu0 %v1796
    %2145 = vmatprep.subr.mxu0 0.0
    %2146 = vmatpush1.msra.mxu0 %v1795
    %2147 = vmatprep.subr.mxu0 0.0
    %2148 = vmatpush1.msra.mxu0 %v1794
    %2149 = vmatprep.subr.mxu0 0.0
    %2150 = vmatpush1.msra.mxu0 %v1793
    %2151 = vmatprep.subr.mxu0 0.0
    %2152 = vmatpush1.msra.mxu0 %v1792
    %2153 = vmatprep.subr.mxu0 0.0
    %2154 = vmatpush1.msra.mxu0 %v1791
    %2155 = vmatprep.subr.mxu0 0.0
    %2156 = vmatpush1.msra.mxu0 %v1790
    %2157 = vmatprep.subr.mxu0 0.0
    %2158 = vmatpush1.msra.mxu0 %v1789
    %2159 = vmatprep.subr.mxu0 0.0
    %2160 = vmatpush1.msra.mxu0 %v1788
    %2161 = vmatprep.subr.mxu0 0.0
    %2162 = vmatpush1.msra.mxu0 %v1787
    %2163 = vmatprep.subr.mxu0 0.0
    %2164 = vmatpush1.msra.mxu0 %v1786
    %2165 = vmatprep.subr.mxu0 0.0
    %2166 = vmatpush2.msra.mxu0 %v1817
    %2167 = vmatprep.subr.mxu0 0.0
    %2168 = vmatpush2.msra.mxu0 %v1816
    %2169 = vmatprep.subr.mxu0 0.0
    %2170 = vmatpush2.msra.mxu0 %v1815
    %2171 = vmatprep.subr.mxu0 0.0
    %2172 = vmatpush2.msra.mxu0 %v1814
    %2173 = vmatprep.subr.mxu0 0.0
    %2174 = vmatpush2.msra.mxu0 %v1813
    %2175 = vmatprep.subr.mxu0 0.0
    %2176 = vmatpush2.msra.mxu0 %v1812
    %2177 = vmatprep.subr.mxu0 0.0
    %2178 = vmatpush2.msra.mxu0 %v1811
    %2179 = vmatprep.subr.mxu0 0.0
    %2180 = vmatpush2.msra.mxu0 %v1810
    %2181 = vmatprep.subr.mxu0 0.0
    %2182 = vmatpush2.msra.mxu0 %v1809
    %2183 = vmatprep.subr.mxu0 0.0
    %2184 = vmatpush2.msra.mxu0 %v1808
    %2185 = vmatprep.subr.mxu0 0.0
    %2186 = vmatpush2.msra.mxu0 %v1807
    %2187 = vmatprep.subr.mxu0 0.0
    %2188 = vmatpush2.msra.mxu0 %v1806
    %2189 = vmatprep.subr.mxu0 0.0
    %2190 = vmatpush2.msra.mxu0 %v1805
    %2191 = vmatprep.subr.mxu0 0.0
    %2192 = vmatpush2.msra.mxu0 %v1804
    %2193 = vmatprep.subr.mxu0 0.0
    %2194 = vmatpush2.msra.mxu0 %v1803
    %2195 = vmatprep.subr.mxu0 0.0
    %2196 = vmatpush2.msra.mxu0 %v1802
    %2197 = vmatprep.mubr.f32.mxu0 %v1633
    %2198 = vmatmul.mubr.f32.gmra.mxu0 %v1632
    %v2199 = vpop.f32.mrf.mxu0
    %v2200 = vadd.f32 %v2095, %v2199
    %v2201 = vpop.f32.mrf.mxu0
    %2202 = vmatprep.mubr.f32.mxu0 %v1641
    %2203 = vmatmul.mubr.f32.gmra.mxu0 %v1640
    %v2204 = vpop.f32.mrf.mxu0
    %v2205 = vadd.f32 %v2100, %v2204
    %v2206 = vpop.f32.mrf.mxu0
    %2207 = vmatprep.mubr.f32.mxu0 %v1649
    %2208 = vmatmul.mubr.f32.gmra.mxu0 %v1648
    %v2209 = vpop.f32.mrf.mxu0
    %v2210 = vadd.f32 %v2105, %v2209
    %v2211 = vpop.f32.mrf.mxu0
    %2212 = vmatprep.mubr.f32.mxu0 %v1657
    %2213 = vmatmul.mubr.f32.gmra.mxu0 %v1656
    %v2214 = vpop.f32.mrf.mxu0
    %v2215 = vadd.f32 %v2110, %v2214
    %v2216 = vpop.f32.mrf.mxu0
    %2217 = vmatprep.mubr.f32.mxu0 %v1665
    %2218 = vmatmul.mubr.f32.gmra.mxu0 %v1664
    %v2219 = vpop.f32.mrf.mxu0
    %v2220 = vadd.f32 %v2115, %v2219
    %v2221 = vpop.f32.mrf.mxu0
    %2222 = vmatprep.mubr.f32.mxu0 %v1673
    %2223 = vmatmul.mubr.f32.gmra.mxu0 %v1672
    %v2224 = vpop.f32.mrf.mxu0
    %v2225 = vadd.f32 %v2120, %v2224
    %v2226 = vpop.f32.mrf.mxu0
    %2227 = vmatprep.mubr.f32.mxu0 %v1681
    %2228 = vmatmul.mubr.f32.gmra.mxu0 %v1680
    %v2229 = vpop.f32.mrf.mxu0
    %v2230 = vadd.f32 %v2125, %v2229
    %v2231 = vpop.f32.mrf.mxu0
    %2232 = vmatprep.mubr.f32.mxu0 %v1689
    %2233 = vmatmul.mubr.f32.gmra.mxu0 %v1688
    %v2234 = vpop.f32.mrf.mxu0
    %v2235 = vadd.f32 %v2130, %v2234
    %v2236 = vpop.f32.mrf.mxu0
    %2237 = vdwg.mxu0
    %v2238 = vmax.f32 %v2200, 0.0
    %v2239 = vmax.f32 %v2205, 0.0
    %v2240 = vmax.f32 %v2210, 0.0
    %v2241 = vmax.f32 %v2215, 0.0
    %v2242 = vmax.f32 %v2220, 0.0
    %v2243 = vmax.f32 %v2225, 0.0
    %v2244 = vmax.f32 %v2230, 0.0
    %v2245 = vmax.f32 %v2235, 0.0
    %v2246 = vld [vmem:[%s3] sm:$0x1]
    %v2248 = vlaneseq
    %v2249 = vshrl.u32 %v2248, 7
    %v2250 = vsub.s32 0, %v2249
    %v2251 = vrot.slane %v2246, %v2250
    %v2253 = vmul.f32 %v2238, %v2251
    %v2254 = vmul.f32 %v2239, %v2251
    %v2255 = vmul.f32 %v2240, %v2251
    %v2256 = vmul.f32 %v2241, %v2251
    %v2257 = vmul.f32 %v2242, %v2251
    %v2258 = vmul.f32 %v2243, %v2251
    %v2259 = vmul.f32 %v2244, %v2251
    %v2260 = vmul.f32 %v2245, %v2251
    %2261 = vadd.xlane.f32.xlu0 %v2253
    %v2262 = vpop.xlane.xlu0 %2261
    %2263 = vadd.xlane.f32.xlu0 %v2254
    %v2264 = vpop.xlane.xlu0 %2263
    %2265 = vadd.xlane.f32.xlu0 %v2255
    %v2266 = vpop.xlane.xlu0 %2265
    %2267 = vadd.xlane.f32.xlu0 %v2256
    %v2268 = vpop.xlane.xlu0 %2267
    %2269 = vadd.xlane.f32.xlu0 %v2257
    %v2270 = vpop.xlane.xlu0 %2269
    %2271 = vadd.xlane.f32.xlu0 %v2258
    %v2272 = vpop.xlane.xlu0 %2271
    %2273 = vadd.xlane.f32.xlu0 %v2259
    %v2274 = vpop.xlane.xlu0 %2273
    %2275 = vadd.xlane.f32.xlu0 %v2260
    %v2276 = vpop.xlane.xlu0 %2275
    %s2277 = sld [smem:[#allocation2]]
    %v2278 = vstv %s2277
    %v2279 = vadd.f32 %v2262, %v2278
    %v2280 = vadd.f32 %v2264, %v2278
    %v2281 = vadd.f32 %v2266, %v2278
    %v2282 = vadd.f32 %v2268, %v2278
    %v2283 = vadd.f32 %v2270, %v2278
    %v2284 = vadd.f32 %v2272, %v2278
    %v2285 = vadd.f32 %v2274, %v2278
    %v2286 = vadd.f32 %v2276, %v2278
    %vm2287 = vcmask 7168
    %2288 = vst.msk [vmem:[%s5] sm:$0xff] %vm2287, %v2279
    %2289 = vst.msk [vmem:[%s5 + $0x8] sm:$0xff] %vm2287, %v2280
    %2290 = vst.msk [vmem:[%s5 + $0x10] sm:$0xff] %vm2287, %v2281
    %2291 = vst.msk [vmem:[%s5 + $0x18] sm:$0xff] %vm2287, %v2282
    %2292 = vst.msk [vmem:[%s5 + $0x20] sm:$0xff] %vm2287, %v2283
    %2293 = vst.msk [vmem:[%s5 + $0x28] sm:$0xff] %vm2287, %v2284
    %2294 = vst.msk [vmem:[%s5 + $0x30] sm:$0xff] %vm2287, %v2285
    %2295 = vst.msk [vmem:[%s5 + $0x38] sm:$0xff] %vm2287, %v2286
    // Predicated region
    $region34: #{ntl_relation.1} parent=1 // pred_check
      _
    $region35: #{ntl_relation.1} parent=1 // pred_check_branch
      %2297 = sbr.rel (0) target = $region37
    $region36: #{ntl_relation.1} parent=1 // pred_region
      _
    $region37: #{ntl_relation.1} parent=1 // pred_fallthru
      _
    // Predicated region
    $region38: #{ntl_relation.1} parent=1 // pred_check
      _
    $region39: #{ntl_relation.1} parent=1 // pred_check_branch
      %2299 = sbr.rel (0) target = $region41
    $region40: #{ntl_relation.1} parent=1 // pred_region
      _
    $region41: #{ntl_relation.1} parent=1 // pred_fallthru
      _
    %2300 = vsyncpa [#allocation4], 1
    %2301 = vsyncpa [#allocation6], 1

</llo_original>
